<compile_context>
chip_gen: v6e
topology: v6e:2x2x1
jax: 0.10.0
libtpu: 0.0.40
codegen_flags: <defaults>
</compile_context>

<pallas_src>
import functools

import jax
import jax.numpy as jnp
import numpy as np
from jax import lax
from jax.experimental import pallas as pl
from jax.experimental.pallas import tpu as pltpu

_LANE = 128
_VMEM_LIMIT = 48 * 1024 * 1024   # explicit scoped-VMEM budget (safe on v7x 64MiB)
_BN_EPS = 1e-5                   # PyTorch BatchNorm2d default


# ------------------------------ small helpers ------------------------------ #

def _round_up(x, m):
    return (x + m - 1) // m * m


def _pad_axis(a, axis, target):
    if a.shape[axis] >= target:
        return a
    cfg = [(0, 0)] * a.ndim
    cfg[axis] = (0, target - a.shape[axis])
    return jnp.pad(a, cfg)


def _pick_row_tile(ho):
    """Output-row tile size (must divide Ho)."""
    for cand in (8, 4, 2):
        if ho % cand == 0:
            return cand
    return 1


def _compiler_params():
    return pltpu.CompilerParams(
        dimension_semantics=("parallel", "parallel"),
        vmem_limit_bytes=_VMEM_LIMIT)


# ----------------------------- Pallas kernels ------------------------------ #

def _conv3x3_accumulate(win, w_ref, *, th, wo, stride):
    """3x3 conv of a row window against HWIO weights.

    win:   ((th-1)*stride + 3, Wp, Ci) value — includes the 1-pixel halo.
    w_ref: (3, 3, Ci, Co) ref.
    Returns a (th*wo, Co) float32 accumulator.
    """
    ci = win.shape[-1]
    co = w_ref.shape[-1]
    # One-time polyphase split along W so strided taps become contiguous slices.
    if stride == 1:
        phases = [win]
    else:
        phases = [win[:, p::stride, :] for p in range(stride)]
    acc = jnp.zeros((th * wo, co), jnp.float32)
    for kh in range(3):
        for kw in range(3):
            ph = phases[kw % stride]
            c0 = kw // stride
            patch = ph[kh:kh + (th - 1) * stride + 1:stride, c0:c0 + wo, :]
            # (th, wo, ci) -> (th*wo, ci): layout-preserving when wo % 8 == 0.
            acc = acc + jnp.dot(patch.reshape(th * wo, ci), w_ref[kh, kw],
                                preferred_element_type=jnp.float32)
    return acc


def _conv3x3_bn_relu_kernel(x_ref, w_ref, scale_ref, shift_ref, o_ref, *,
                            stride, th):
    """relu(bn1(conv1(X))) for one batch element / one tile of TH output rows.

    x_ref:     (1, Hp, Wp, Cip)  zero-padded (halo + lane-pad) input, resident
    w_ref:     (3, 3, Cip, Cop)
    scale_ref: (1, Cop) f32      folded BN scale
    shift_ref: (1, Cop) f32      folded BN shift (includes conv bias)
    o_ref:     (1, TH, Wo, Cop)  lane-dense output row tile
    """
    i = pl.program_id(1)
    _, _, wo, co = o_ref.shape
    row0 = pl.multiple_of(i * th * stride, th * stride)
    win = x_ref[0, pl.ds(row0, (th - 1) * stride + 3), :, :]
    acc = _conv3x3_accumulate(win, w_ref, th=th, wo=wo, stride=stride)
    y = jnp.maximum(acc * scale_ref[...] + shift_ref[...], 0.0)
    o_ref[...] = y.reshape(1, th, wo, co).astype(o_ref.dtype)


def _conv3x3_bn_add_relu_kernel(y_ref, x_ref, w2_ref, s2_ref, b2_ref, o_ref, *,
                                th):
    """relu(bn2(conv2(Y)) + X) — identity shortcut (strides=1, Cin==Cout)."""
    i = pl.program_id(1)
    _, _, wo, co = o_ref.shape
    row0 = pl.multiple_of(i * th, th)
    ywin = y_ref[0, pl.ds(row0, th + 2), :, :]
    acc = _conv3x3_accumulate(ywin, w2_ref, th=th, wo=wo, stride=1)
    # identity shortcut = interior (un-padded region) of the padded input X
    sc = x_ref[0, pl.ds(row0 + 1, th), 1:1 + wo, :]
    y = acc * s2_ref[...] + b2_ref[...] + sc.reshape(th * wo, co).astype(jnp.float32)
    o_ref[...] = jnp.maximum(y, 0.0).reshape(1, th, wo, co).astype(o_ref.dtype)


def _conv3x3_bn_add1x1_relu_kernel(y_ref, x_ref, w2_ref, s2_ref, b2_ref,
                                   w3_ref, s3_ref, b3_ref, o_ref, *,
                                   th, sc_stride):
    """relu(bn2(conv2(Y)) + bn3(conv3_1x1(X))) — fused projection shortcut."""
    i = pl.program_id(1)
    _, _, wo, co = o_ref.shape
    ci = x_ref.shape[-1]
    row0 = pl.multiple_of(i * th, th)
    ywin = y_ref[0, pl.ds(row0, th + 2), :, :]
    acc = _conv3x3_accumulate(ywin, w2_ref, th=th, wo=wo, stride=1)

    # 1x1 strided projection on the same padded X (interior offset +1); fusing
    # it here avoids a separate kernel and an HBM round-trip for the shortcut.
    s = sc_stride
    xwin = x_ref[0, pl.ds(1 + i * th * s, (th - 1) * s + 1), :, :]
    xs = xwin[::s, 1:(wo - 1) * s + 2:s, :]              # (th, wo, ci)
    sc = jnp.dot(xs.reshape(th * wo, ci), w3_ref[...],
                 preferred_element_type=jnp.float32)
    sc = sc * s3_ref[...] + b3_ref[...]

    y = acc * s2_ref[...] + b2_ref[...] + sc
    o_ref[...] = jnp.maximum(y, 0.0).reshape(1, th, wo, co).astype(o_ref.dtype)


# ------------------------------ pallas_call wrappers ------------------------ #

def conv3x3_bn_relu(xp, w, scale, shift, *, stride):
    N, Hp, Wp, Cip = xp.shape
    Cop = w.shape[-1]
    Ho = (Hp - 3) // stride + 1
    Wo = (Wp - 3) // stride + 1
    th = _pick_row_tile(Ho)
    return pl.pallas_call(
        functools.partial(_conv3x3_bn_relu_kernel, stride=stride, th=th),
        out_shape=jax.ShapeDtypeStruct((N, Ho, Wo, Cop), xp.dtype),
        grid=(N, Ho // th),
        in_specs=[
            pl.BlockSpec((1, Hp, Wp, Cip), lambda n, i: (n, 0, 0, 0)),
            pl.BlockSpec((3, 3, Cip, Cop), lambda n, i: (0, 0, 0, 0)),
            pl.BlockSpec((1, Cop), lambda n, i: (0, 0)),
            pl.BlockSpec((1, Cop), lambda n, i: (0, 0)),
        ],
        out_specs=pl.BlockSpec((1, th, Wo, Cop), lambda n, i: (n, i, 0, 0)),
        compiler_params=_compiler_params(),
    )(xp, w, scale, shift)


def conv3x3_bn_add_relu(yp, xp, w2, s2, b2, proj=None, *, sc_stride=1):
    """Second conv of the block, fused with BN, residual add (+ optional fused
    1x1 projection shortcut) and final ReLU."""
    N, Hop, Wop, Cop = yp.shape
    Ho, Wo = Hop - 2, Wop - 2
    _, Hp, Wp, Cip = xp.shape
    th = _pick_row_tile(Ho)

    in_specs = [
        pl.BlockSpec((1, Hop, Wop, Cop), lambda n, i: (n, 0, 0, 0)),
        pl.BlockSpec((1, Hp, Wp, Cip), lambda n, i: (n, 0, 0, 0)),
        pl.BlockSpec((3, 3, Cop, Cop), lambda n, i: (0, 0, 0, 0)),
        pl.BlockSpec((1, Cop), lambda n, i: (0, 0)),
        pl.BlockSpec((1, Cop), lambda n, i: (0, 0)),
    ]
    args = [yp, xp, w2, s2, b2]
    if proj is None:
        kernel = functools.partial(_conv3x3_bn_add_relu_kernel, th=th)
    else:
        w3, s3, b3 = proj
        in_specs += [
            pl.BlockSpec((Cip, Cop), lambda n, i: (0, 0)),
            pl.BlockSpec((1, Cop), lambda n, i: (0, 0)),
            pl.BlockSpec((1, Cop), lambda n, i: (0, 0)),
        ]
        args += [w3, s3, b3]
        kernel = functools.partial(_conv3x3_bn_add1x1_relu_kernel, th=th,
                                   sc_stride=sc_stride)

    return pl.pallas_call(
        kernel,
        out_shape=jax.ShapeDtypeStruct((N, Ho, Wo, Cop), yp.dtype),
        grid=(N, Ho // th),
        in_specs=in_specs,
        out_specs=pl.BlockSpec((1, th, Wo, Cop), lambda n, i: (n, i, 0, 0)),
        compiler_params=_compiler_params(),
    )(*args)


# --------------------------- parameters / module ---------------------------- #

def _fold_bn(gamma, beta, mean, var, conv_bias):
    """Fold inference-mode BN (+ conv bias) into per-channel scale/shift."""
    s = gamma / jnp.sqrt(var + _BN_EPS)
    b = beta - mean * s + conv_bias * s
    return s, b


def init_residual_params(key, input_channels, num_channels, use_1x1conv=False):
    ks = jax.random.split(key, 20)
    n = num_channels

    def nrm(k, shape, scale=0.1):
        return scale * jax.random.normal(k, shape, jnp.float32)

    def bn(k0, k1, k2, k3):
        gamma = 1.0 + nrm(k0, (n,))
        beta = nrm(k1, (n,))
        mean = nrm(k2, (n,))
        var = 1.0 + 0.1 * jax.random.uniform(k3, (n,), jnp.float32)
        return gamma, beta, mean, var

    w1 = nrm(ks[0], (3, 3, input_channels, n))          # HWIO
    bias1 = nrm(ks[1], (n,))
    w2 = nrm(ks[2], (3, 3, n, n))
    bias2 = nrm(ks[3], (n,))
    s1, b1 = _fold_bn(*bn(ks[4], ks[5], ks[6], ks[7]), bias1)
    s2, b2 = _fold_bn(*bn(ks[8], ks[9], ks[10], ks[11]), bias2)

    params = {"w1": w1, "s1": s1, "b1": b1,
              "w2": w2, "s2": s2, "b2": b2,
              "w3": None, "s3": None, "b3": None}
    if use_1x1conv:
        w3 = nrm(ks[12], (input_channels, n))            # 1x1 conv as (Cin, Cout)
        bias3 = nrm(ks[13], (n,))
        s3, b3 = _fold_bn(*bn(ks[14], ks[15], ks[16], ks[17]), bias3)
        params.update({"w3": w3, "s3": s3, "b3": b3})
    return params


def residual_forward(params, x_nchw, *, strides=1, compute_dtype=jnp.float32):
    """Pallas implementation of Residual.forward (inference-mode BN)."""
    N, Cin, H, W = x_nchw.shape
    Cout = params["w1"].shape[-1]
    cin_p = _round_up(Cin, _LANE)
    cout_p = _round_up(Cout, _LANE)

    # One fused preprocessing pass: NCHW->NHWC + cast + halo pad + lane pad.
    # TODO(synk): when chaining residual blocks keep NHWC / lane-padded layout
    # end-to-end and drop the boundary transposes & pads.
    x = jnp.transpose(x_nchw, (0, 2, 3, 1)).astype(compute_dtype)
    xp = jnp.pad(x, ((0, 0), (1, 1), (1, 1), (0, cin_p - Cin)))

    # Lane-dense (128-multiple channel) packing of weights & folded BN params.
    w1 = _pad_axis(_pad_axis(params["w1"].astype(compute_dtype), 2, cin_p), 3, cout_p)
    w2 = _pad_axis(_pad_axis(params["w2"].astype(compute_dtype), 2, cout_p), 3, cout_p)
    s1 = _pad_axis(params["s1"].astype(jnp.float32)[None, :], 1, cout_p)
    b1 = _pad_axis(params["b1"].astype(jnp.float32)[None, :], 1, cout_p)
    s2 = _pad_axis(params["s2"].astype(jnp.float32)[None, :], 1, cout_p)
    b2 = _pad_axis(params["b2"].astype(jnp.float32)[None, :], 1, cout_p)

    # Y = relu(bn1(conv1(X)))   — fused kernel 1
    y = conv3x3_bn_relu(xp, w1, s1, b1, stride=strides)

    # conv2 needs a 1-pixel halo on Y.
    # TODO(synk): fold this pad into kernel 1's output blocks to save one HBM pass.
    yp = jnp.pad(y, ((0, 0), (1, 1), (1, 1), (0, 0)))

    # relu(bn2(conv2(Y)) + shortcut)   — fused kernel 2 (shortcut fused in)
    if params["w3"] is not None:
        w3 = _pad_axis(_pad_axis(params["w3"].astype(compute_dtype), 0, cin_p), 1, cout_p)
        s3 = _pad_axis(params["s3"].astype(jnp.float32)[None, :], 1, cout_p)
        b3 = _pad_axis(params["b3"].astype(jnp.float32)[None, :], 1, cout_p)
        out = conv3x3_bn_add_relu(yp, xp, w2, s2, b2, proj=(w3, s3, b3),
                                  sc_stride=strides)
    else:
        assert strides == 1 and Cin == Cout, \
            "identity shortcut requires strides=1 and Cin == Cout"
        out = conv3x3_bn_add_relu(yp, xp, w2, s2, b2)

    out = out[..., :Cout].astype(x_nchw.dtype)
    return jnp.transpose(out, (0, 3, 1, 2))  # NHWC -> NCHW


# ------------------------------ reference ----------------------------------- #

def residual_reference(params, x_nchw, strides):
    """Plain-JAX f32 reference (for correctness check only)."""
    x = jnp.transpose(x_nchw, (0, 2, 3, 1))

    def conv(inp, w, stride, pad):
        return lax.conv_general_dilated(
            inp, w, (stride, stride), [(pad, pad), (pad, pad)],
            dimension_numbers=("NHWC", "HWIO", "NHWC"))

    y = jnp.maximum(conv(x, params["w1"], strides, 1) * params["s1"]
                    + params["b1"], 0.0)
    y2 = conv(y, params["w2"], 1, 1) * params["s2"] + params["b2"]
    if params["w3"] is not None:
        sc = conv(x, params["w3"][None, None], strides, 0) * params["s3"] \
             + params["b3"]
    else:
        sc = x
    out = jnp.maximum(y2 + sc, 0.0)
    return jnp.transpose(out, (0, 3, 1, 2))


# --------------------------------- main -------------------------------------- #

if __name__ == "__main__":
    key = jax.random.PRNGKey(0)
    kx1, kp1, kx2, kp2 = jax.random.split(key, 4)

    # Case 1: module defaults (use_1x1conv=False, strides=1), identity shortcut.
    x1 = jax.random.normal(kx1, (2, 4, 16, 16), jnp.float32)   # NCHW
    p1 = init_residual_params(kp1, input_channels=4, num_channels=4,
                              use_1x1conv=False)
    out1 = residual_forward(p1, x1, strides=1)
    jax.block_until_ready(out1)
    assert out1.shape == (2, 4, 16, 16)
    np.testing.assert_allclose(np.asarray(out1),
                               np.asarray(residual_reference(p1, x1, 1)),
                               rtol=1e-4, atol=1e-4)

    # Case 2: downsampling path (use_1x1conv=True, strides=2), 4 -> 8 channels.
    x2 = jax.random.normal(kx2, (2, 4, 16, 16), jnp.float32)
    p2 = init_residual_params(kp2, input_channels=4, num_channels=8,
                              use_1x1conv=True)
    out2 = residual_forward(p2, x2, strides=2)
    jax.block_until_ready(out2)
    assert out2.shape == (2, 8, 8, 8)
    np.testing.assert_allclose(np.asarray(out2),
                               np.asarray(residual_reference(p2, x2, 2)),
                               rtol=1e-4, atol=1e-4)

    # Case 3: bf16 activations/weights on the MXU (f32 accumulate + epilogue),
    # compared loosely against the f32 reference.
    out3 = residual_forward(p2, x2, strides=2, compute_dtype=jnp.bfloat16)
    jax.block_until_ready(out3)
    assert out3.shape == (2, 8, 8, 8)
    np.testing.assert_allclose(np.asarray(out3),
                               np.asarray(residual_reference(p2, x2, 2)),
                               rtol=5e-2, atol=5e-2)

    print("KERNEL_OK")
</pallas_src>

<mosaic_0001>
module attributes {stable_mosaic.version = 11 : i64} {
  func.func @_conv3x3_bn_relu_kernel(%arg0: i32, %arg1: i32, %arg2: memref<1x18x18x128xf32, #tpu.memory_space<vmem>>, %arg3: memref<3x3x128x128xf32, #tpu.memory_space<vmem>>, %arg4: memref<1x128xf32, #tpu.memory_space<vmem>>, %arg5: memref<1x128xf32, #tpu.memory_space<vmem>>, %arg6: memref<1x8x16x128xf32, #tpu.memory_space<vmem>>) attributes {dimension_semantics = [#tpu.dimension_semantics<parallel>, #tpu.dimension_semantics<parallel>], iteration_bounds = array<i64: 2, 2>, scalar_prefetch = 0 : i64, scratch_operands = 0 : i64, tpu.core_type = #tpu.core_type<tc>, window_params = [{transform_indices = @transform_0, window_bounds = array<i64: 1, 18, 18, 128>}, {pipeline_mode = #tpu.pipeline_mode<synchronous>, transform_indices = @transform_1, window_bounds = array<i64: 3, 3, 128, 128>}, {pipeline_mode = #tpu.pipeline_mode<synchronous>, transform_indices = @transform_2, window_bounds = array<i64: 1, 128>}, {pipeline_mode = #tpu.pipeline_mode<synchronous>, transform_indices = @transform_3, window_bounds = array<i64: 1, 128>}, {transform_indices = @transform_4, window_bounds = array<i64: 1, 8, 16, 128>}]} {
    %c8_i32 = arith.constant 8 : i32
    %0 = arith.muli %arg1, %c8_i32 : i32
    %c1_i32 = arith.constant 1 : i32
    %1 = arith.muli %0, %c1_i32 : i32
    %2 = tpu.assume_multiple %1, 8 : i32
    %c0 = arith.constant 0 : index
    %3 = arith.index_cast %2 : i32 to index
    %c0_0 = arith.constant 0 : index
    %c0_1 = arith.constant 0 : index
    %4 = vector.load %arg2[%c0, %3, %c0_0, %c0_1] : memref<1x18x18x128xf32, #tpu.memory_space<vmem>>, vector<1x10x18x128xf32>
    %5 = vector.shape_cast %4 : vector<1x10x18x128xf32> to vector<10x18x128xf32>
    %cst = arith.constant 0.000000e+00 : f32
    %6 = vector.broadcast %cst : f32 to vector<128x128xf32>
    %7 = vector.extract_strided_slice %5 {offsets = [0, 0, 0], sizes = [8, 16, 128], strides = [1, 1, 1]} : vector<10x18x128xf32> to vector<8x16x128xf32>
    %8 = vector.shape_cast %7 : vector<8x16x128xf32> to vector<128x128xf32>
    %c0_2 = arith.constant 0 : index
    %c0_3 = arith.constant 0 : index
    %c0_4 = arith.constant 0 : index
    %c0_5 = arith.constant 0 : index
    %9 = vector.load %arg3[%c0_2, %c0_3, %c0_4, %c0_5] : memref<3x3x128x128xf32, #tpu.memory_space<vmem>>, vector<1x1x128x128xf32>
    %10 = vector.shape_cast %9 : vector<1x1x128x128xf32> to vector<128x128xf32>
    %cst_6 = arith.constant dense<0.000000e+00> : vector<128x128xf32>
    %11 = tpu.matmul %8, %10, %cst_6 {dimension_numbers = #tpu.dot_dimension_numbers<[1], [0], [0], [1], [0, 0, 1, 1], [], []>} : vector<128x128xf32>, vector<128x128xf32>, vector<128x128xf32> -> vector<128x128xf32>
    %12 = arith.addf %6, %11 : vector<128x128xf32>
    %13 = vector.extract_strided_slice %5 {offsets = [0, 1, 0], sizes = [8, 16, 128], strides = [1, 1, 1]} : vector<10x18x128xf32> to vector<8x16x128xf32>
    %14 = vector.shape_cast %13 : vector<8x16x128xf32> to vector<128x128xf32>
    %c0_7 = arith.constant 0 : index
    %c1 = arith.constant 1 : index
    %c0_8 = arith.constant 0 : index
    %c0_9 = arith.constant 0 : index
    %15 = vector.load %arg3[%c0_7, %c1, %c0_8, %c0_9] : memref<3x3x128x128xf32, #tpu.memory_space<vmem>>, vector<1x1x128x128xf32>
    %16 = vector.shape_cast %15 : vector<1x1x128x128xf32> to vector<128x128xf32>
    %cst_10 = arith.constant dense<0.000000e+00> : vector<128x128xf32>
    %17 = tpu.matmul %14, %16, %cst_10 {dimension_numbers = #tpu.dot_dimension_numbers<[1], [0], [0], [1], [0, 0, 1, 1], [], []>} : vector<128x128xf32>, vector<128x128xf32>, vector<128x128xf32> -> vector<128x128xf32>
    %18 = arith.addf %12, %17 : vector<128x128xf32>
    %19 = vector.extract_strided_slice %5 {offsets = [0, 2, 0], sizes = [8, 16, 128], strides = [1, 1, 1]} : vector<10x18x128xf32> to vector<8x16x128xf32>
    %20 = vector.shape_cast %19 : vector<8x16x128xf32> to vector<128x128xf32>
    %c0_11 = arith.constant 0 : index
    %c2 = arith.constant 2 : index
    %c0_12 = arith.constant 0 : index
    %c0_13 = arith.constant 0 : index
    %21 = vector.load %arg3[%c0_11, %c2, %c0_12, %c0_13] : memref<3x3x128x128xf32, #tpu.memory_space<vmem>>, vector<1x1x128x128xf32>
    %22 = vector.shape_cast %21 : vector<1x1x128x128xf32> to vector<128x128xf32>
    %cst_14 = arith.constant dense<0.000000e+00> : vector<128x128xf32>
    %23 = tpu.matmul %20, %22, %cst_14 {dimension_numbers = #tpu.dot_dimension_numbers<[1], [0], [0], [1], [0, 0, 1, 1], [], []>} : vector<128x128xf32>, vector<128x128xf32>, vector<128x128xf32> -> vector<128x128xf32>
    %24 = arith.addf %18, %23 : vector<128x128xf32>
    %25 = vector.extract_strided_slice %5 {offsets = [1, 0, 0], sizes = [8, 16, 128], strides = [1, 1, 1]} : vector<10x18x128xf32> to vector<8x16x128xf32>
    %26 = vector.shape_cast %25 : vector<8x16x128xf32> to vector<128x128xf32>
    %c1_15 = arith.constant 1 : index
    %c0_16 = arith.constant 0 : index
    %c0_17 = arith.constant 0 : index
    %c0_18 = arith.constant 0 : index
    %27 = vector.load %arg3[%c1_15, %c0_16, %c0_17, %c0_18] : memref<3x3x128x128xf32, #tpu.memory_space<vmem>>, vector<1x1x128x128xf32>
    %28 = vector.shape_cast %27 : vector<1x1x128x128xf32> to vector<128x128xf32>
    %cst_19 = arith.constant dense<0.000000e+00> : vector<128x128xf32>
    %29 = tpu.matmul %26, %28, %cst_19 {dimension_numbers = #tpu.dot_dimension_numbers<[1], [0], [0], [1], [0, 0, 1, 1], [], []>} : vector<128x128xf32>, vector<128x128xf32>, vector<128x128xf32> -> vector<128x128xf32>
    %30 = arith.addf %24, %29 : vector<128x128xf32>
    %31 = vector.extract_strided_slice %5 {offsets = [1, 1, 0], sizes = [8, 16, 128], strides = [1, 1, 1]} : vector<10x18x128xf32> to vector<8x16x128xf32>
    %32 = vector.shape_cast %31 : vector<8x16x128xf32> to vector<128x128xf32>
    %c1_20 = arith.constant 1 : index
    %c1_21 = arith.constant 1 : index
    %c0_22 = arith.constant 0 : index
    %c0_23 = arith.constant 0 : index
    %33 = vector.load %arg3[%c1_20, %c1_21, %c0_22, %c0_23] : memref<3x3x128x128xf32, #tpu.memory_space<vmem>>, vector<1x1x128x128xf32>
    %34 = vector.shape_cast %33 : vector<1x1x128x128xf32> to vector<128x128xf32>
    %cst_24 = arith.constant dense<0.000000e+00> : vector<128x128xf32>
    %35 = tpu.matmul %32, %34, %cst_24 {dimension_numbers = #tpu.dot_dimension_numbers<[1], [0], [0], [1], [0, 0, 1, 1], [], []>} : vector<128x128xf32>, vector<128x128xf32>, vector<128x128xf32> -> vector<128x128xf32>
    %36 = arith.addf %30, %35 : vector<128x128xf32>
    %37 = vector.extract_strided_slice %5 {offsets = [1, 2, 0], sizes = [8, 16, 128], strides = [1, 1, 1]} : vector<10x18x128xf32> to vector<8x16x128xf32>
    %38 = vector.shape_cast %37 : vector<8x16x128xf32> to vector<128x128xf32>
    %c1_25 = arith.constant 1 : index
    %c2_26 = arith.constant 2 : index
    %c0_27 = arith.constant 0 : index
    %c0_28 = arith.constant 0 : index
    %39 = vector.load %arg3[%c1_25, %c2_26, %c0_27, %c0_28] : memref<3x3x128x128xf32, #tpu.memory_space<vmem>>, vector<1x1x128x128xf32>
    %40 = vector.shape_cast %39 : vector<1x1x128x128xf32> to vector<128x128xf32>
    %cst_29 = arith.constant dense<0.000000e+00> : vector<128x128xf32>
    %41 = tpu.matmul %38, %40, %cst_29 {dimension_numbers = #tpu.dot_dimension_numbers<[1], [0], [0], [1], [0, 0, 1, 1], [], []>} : vector<128x128xf32>, vector<128x128xf32>, vector<128x128xf32> -> vector<128x128xf32>
    %42 = arith.addf %36, %41 : vector<128x128xf32>
    %43 = vector.extract_strided_slice %5 {offsets = [2, 0, 0], sizes = [8, 16, 128], strides = [1, 1, 1]} : vector<10x18x128xf32> to vector<8x16x128xf32>
    %44 = vector.shape_cast %43 : vector<8x16x128xf32> to vector<128x128xf32>
    %c2_30 = arith.constant 2 : index
    %c0_31 = arith.constant 0 : index
    %c0_32 = arith.constant 0 : index
    %c0_33 = arith.constant 0 : index
    %45 = vector.load %arg3[%c2_30, %c0_31, %c0_32, %c0_33] : memref<3x3x128x128xf32, #tpu.memory_space<vmem>>, vector<1x1x128x128xf32>
    %46 = vector.shape_cast %45 : vector<1x1x128x128xf32> to vector<128x128xf32>
    %cst_34 = arith.constant dense<0.000000e+00> : vector<128x128xf32>
    %47 = tpu.matmul %44, %46, %cst_34 {dimension_numbers = #tpu.dot_dimension_numbers<[1], [0], [0], [1], [0, 0, 1, 1], [], []>} : vector<128x128xf32>, vector<128x128xf32>, vector<128x128xf32> -> vector<128x128xf32>
    %48 = arith.addf %42, %47 : vector<128x128xf32>
    %49 = vector.extract_strided_slice %5 {offsets = [2, 1, 0], sizes = [8, 16, 128], strides = [1, 1, 1]} : vector<10x18x128xf32> to vector<8x16x128xf32>
    %50 = vector.shape_cast %49 : vector<8x16x128xf32> to vector<128x128xf32>
    %c2_35 = arith.constant 2 : index
    %c1_36 = arith.constant 1 : index
    %c0_37 = arith.constant 0 : index
    %c0_38 = arith.constant 0 : index
    %51 = vector.load %arg3[%c2_35, %c1_36, %c0_37, %c0_38] : memref<3x3x128x128xf32, #tpu.memory_space<vmem>>, vector<1x1x128x128xf32>
    %52 = vector.shape_cast %51 : vector<1x1x128x128xf32> to vector<128x128xf32>
    %cst_39 = arith.constant dense<0.000000e+00> : vector<128x128xf32>
    %53 = tpu.matmul %50, %52, %cst_39 {dimension_numbers = #tpu.dot_dimension_numbers<[1], [0], [0], [1], [0, 0, 1, 1], [], []>} : vector<128x128xf32>, vector<128x128xf32>, vector<128x128xf32> -> vector<128x128xf32>
    %54 = arith.addf %48, %53 : vector<128x128xf32>
    %55 = vector.extract_strided_slice %5 {offsets = [2, 2, 0], sizes = [8, 16, 128], strides = [1, 1, 1]} : vector<10x18x128xf32> to vector<8x16x128xf32>
    %56 = vector.shape_cast %55 : vector<8x16x128xf32> to vector<128x128xf32>
    %c2_40 = arith.constant 2 : index
    %c2_41 = arith.constant 2 : index
    %c0_42 = arith.constant 0 : index
    %c0_43 = arith.constant 0 : index
    %57 = vector.load %arg3[%c2_40, %c2_41, %c0_42, %c0_43] : memref<3x3x128x128xf32, #tpu.memory_space<vmem>>, vector<1x1x128x128xf32>
    %58 = vector.shape_cast %57 : vector<1x1x128x128xf32> to vector<128x128xf32>
    %cst_44 = arith.constant dense<0.000000e+00> : vector<128x128xf32>
    %59 = tpu.matmul %56, %58, %cst_44 {dimension_numbers = #tpu.dot_dimension_numbers<[1], [0], [0], [1], [0, 0, 1, 1], [], []>} : vector<128x128xf32>, vector<128x128xf32>, vector<128x128xf32> -> vector<128x128xf32>
    %60 = arith.addf %54, %59 : vector<128x128xf32>
    %c0_45 = arith.constant 0 : index
    %c0_46 = arith.constant 0 : index
    %61 = vector.load %arg4[%c0_45, %c0_46] : memref<1x128xf32, #tpu.memory_space<vmem>>, vector<1x128xf32>
    %62 = vector.broadcast %61 : vector<1x128xf32> to vector<128x128xf32>
    %63 = arith.mulf %60, %62 : vector<128x128xf32>
    %c0_47 = arith.constant 0 : index
    %c0_48 = arith.constant 0 : index
    %64 = vector.load %arg5[%c0_47, %c0_48] : memref<1x128xf32, #tpu.memory_space<vmem>>, vector<1x128xf32>
    %65 = vector.broadcast %64 : vector<1x128xf32> to vector<128x128xf32>
    %66 = arith.addf %63, %65 : vector<128x128xf32>
    %cst_49 = arith.constant 0.000000e+00 : f32
    %67 = vector.broadcast %cst_49 : f32 to vector<128x128xf32>
    %68 = arith.maximumf %66, %67 : vector<128x128xf32>
    %69 = vector.shape_cast %68 : vector<128x128xf32> to vector<1x8x16x128xf32>
    %c0_50 = arith.constant 0 : index
    %c0_51 = arith.constant 0 : index
    %c0_52 = arith.constant 0 : index
    %c0_53 = arith.constant 0 : index
    %70 = vector.load %arg6[%c0_50, %c0_51, %c0_52, %c0_53] : memref<1x8x16x128xf32, #tpu.memory_space<vmem>>, vector<1x8x16x128xf32>
    tpu.vector_store %arg6[%c0_50, %c0_51, %c0_52, %c0_53], %69 {strides = array<i32>} : memref<1x8x16x128xf32, #tpu.memory_space<vmem>>, vector<1x8x16x128xf32>,
    return
  }
  func.func @transform_0(%arg0: i32, %arg1: i32) -> (i32, i32, i32, i32) {
    %c0_i32 = arith.constant 0 : i32
    %c0_i32_0 = arith.constant 0 : i32
    %c0_i32_1 = arith.constant 0 : i32
    %c0_i32_2 = arith.constant 0 : i32
    return %arg0, %c0_i32, %c0_i32_0, %c0_i32_1 : i32, i32, i32, i32
  }
  func.func @transform_1(%arg0: i32, %arg1: i32) -> (i32, i32, i32, i32) {
    %c0_i32 = arith.constant 0 : i32
    %c0_i32_0 = arith.constant 0 : i32
    %c0_i32_1 = arith.constant 0 : i32
    %c0_i32_2 = arith.constant 0 : i32
    %c0_i32_3 = arith.constant 0 : i32
    return %c0_i32, %c0_i32_0, %c0_i32_1, %c0_i32_2 : i32, i32, i32, i32
  }
  func.func @transform_2(%arg0: i32, %arg1: i32) -> (i32, i32) {
    %c0_i32 = arith.constant 0 : i32
    %c0_i32_0 = arith.constant 0 : i32
    %c0_i32_1 = arith.constant 0 : i32
    return %c0_i32, %c0_i32_0 : i32, i32
  }
  func.func @transform_3(%arg0: i32, %arg1: i32) -> (i32, i32) {
    %c0_i32 = arith.constant 0 : i32
    %c0_i32_0 = arith.constant 0 : i32
    %c0_i32_1 = arith.constant 0 : i32
    return %c0_i32, %c0_i32_0 : i32, i32
  }
  func.func @transform_4(%arg0: i32, %arg1: i32) -> (i32, i32, i32, i32) {
    %c0_i32 = arith.constant 0 : i32
    %c0_i32_0 = arith.constant 0 : i32
    %c0_i32_1 = arith.constant 0 : i32
    return %arg0, %arg1, %c0_i32, %c0_i32_0 : i32, i32, i32, i32
  }
}

</mosaic_0001>

<llo_original>
// kernel: tpu_custom_call.1
$region0: #{tpu_custom_call.1}
  #allocation0 [shape = 'u32[]', space=smem, size = 0x4, offset = 0x4, fixed_abs, tag = 'smem constant byte address 0x4 - core index']
  #allocation1 [shape = 'u32[144,128]{1,0:T(1,128)}', space=vmem, size = 0x12000, scoped, tag = 'internal scratch']
  %s0 = inlined_call_operand.vmem [shape: f32[2,18,18,128], index: 0, kind: input, shape index: {}]
  %s1 = inlined_call_operand.vmem [shape: f32[3,3,128,128], index: 1, kind: input, shape index: {}]
  %s2 = inlined_call_operand.vmem [shape: f32[1,128], index: 2, kind: input, shape index: {}]
  %s3 = inlined_call_operand.vmem [shape: f32[1,128], index: 3, kind: input, shape index: {}]
  %s4 = inlined_call_operand.hbm [shape: f32[2,16,16,128], index: 4, kind: output, shape index: {}]
  %s5 = sld [smem:[#allocation0]]
  $region49: #{tpu_custom_call.1} parent=0
    _
  %s7 = ssub.s32 1, %s5
  %s8 = scalar_select 0, %s7, %s5
  $region1: #{tpu_custom_call.1} parent=0
    #allocation2 [shape = 'u8[131072]{0}', space=vmem, size = 0x20000, scoped, tag = 'output window, operand 0']
    #allocation3 [shape = 's32[2]{0}', space=sflag, size = 0x8, scoped, tag = 'scoped memory for tpu_custom_call.1']
    %9 = vsyncpa [#allocation3], 0
    %s10 = scalar_lea.sflag [#allocation3], 1
    %11 = vsyncpa %s10, 0
    loop: start=0, step=1, limit=6
    $region2: #{tpu_custom_call.1} parent=1 // loop_pre_header
      _
    $region3: #{tpu_custom_call.1} parent=1 // loop_header
      %s13 = sphi 0, %s17
      %p14 = scmp.ge.s32.totalorder %s13, 6
      %s20 = sphi 0, %s32
      %s21 = sphi 0, %s28
      %s22 = sphi 0, %s20
      %s23 = sphi 0, %s21
      %s24 = sphi 0, %s22
      %s25 = sphi 0, %s23
      %s35 = sphi 0, %s37
      %s38 = sphi 0, %s35
      %s39 = sphi 0, %s38
      %s55 = sphi 0, %s39
      %s59 = sphi 0, %s59
      %s61 = sphi 0, %s59
      %s62 = sphi 0, %s61
      %s76 = sphi 0, %s62
      %s80 = sphi 0, %s80
      %s82 = sphi 0, %s80
      %s83 = sphi 0, %s82
      %s97 = sphi 0, %s83
      %s101 = sphi 0, %s101
      %s103 = sphi 0, %s101
      %s104 = sphi 0, %s103
      %s118 = sphi 0, %s104
      %s126 = sphi 0, %s128
      %s129 = sphi 0, %s126
      %s130 = sphi 0, %s129
      %s146 = sphi 0, %s130
    $region4: #{tpu_custom_call.1} parent=1 // loop_header_branch
      %16 = sbr.rel (%p14) target = $region8
    $region5: #{tpu_custom_call.1} parent=1 // loop_body
      %s18 = ssub.s32 %s13, 1
      %s19 = ssub.s32 %s13, 2
      %s26 = sadd.s32 1, %s21
      %p27 = scmp.ge.s32.totalorder %s26, 2
      %s28 = scalar_select %p27, 0, %s26
      %s29 = sadd.s32 1, %s20
      %s30 = scalar_select %p27, %s29, %s20
      %p31 = scmp.ge.s32.totalorder %s30, 2
      %s32 = scalar_select %p31, 0, %s30
      %s33 = ssub.s32 %s20, %s32
      %p34 = scmp.eq.s32.totalorder %s33, 0
      %s36 = sadd.s32 %s35, 1
      %s37 = scalar_select %p34, %s35, %s36
      %p40 = pneg %p34
      %p41 = scmp.eq.s32.totalorder %s13, 3
      %p42 = por %p40, %p41
      %p43 = scmp.ne.s32.totalorder %s35, %s38
      %p44 = scmp.eq.s32.totalorder %s13, 0
      %p45 = por %p43, %p44
      %p46 = scmp.ne.s32.totalorder %s35, %s38
      %p47 = scmp.eq.s32.totalorder %s18, 3
      %p48 = por %p46, %p47
      %p49 = scmp.ne.s32.totalorder %s38, %s39
      %p50 = scmp.eq.s32.totalorder %s18, 0
      %p51 = por %p49, %p50
      %p52 = scmp.ne.s32.totalorder %s38, %s39
      %p53 = scmp.eq.s32.totalorder %s19, 3
      %p54 = por %p52, %p53
      %p56 = scmp.ne.s32.totalorder %s39, %s55
      %p57 = scmp.eq.s32.totalorder %s19, 0
      %p58 = por %p56, %p57
      %s60 = sadd.s32 %s59, 1
      %p63 = scmp.eq.s32.totalorder %s13, 3
      %p64 = scmp.ne.s32.totalorder %s59, %s61
      %p65 = scmp.eq.s32.totalorder %s13, 0
      %p66 = por %p64, %p65
      %p67 = scmp.ne.s32.totalorder %s59, %s61
      %p68 = scmp.eq.s32.totalorder %s18, 3
      %p69 = por %p67, %p68
      %p70 = scmp.ne.s32.totalorder %s61, %s62
      %p71 = scmp.eq.s32.totalorder %s18, 0
      %p72 = por %p70, %p71
      %p73 = scmp.ne.s32.totalorder %s61, %s62
      %p74 = scmp.eq.s32.totalorder %s19, 3
      %p75 = por %p73, %p74
      %p77 = scmp.ne.s32.totalorder %s62, %s76
      %p78 = scmp.eq.s32.totalorder %s19, 0
      %p79 = por %p77, %p78
      %s81 = sadd.s32 %s80, 1
      %p84 = scmp.eq.s32.totalorder %s13, 3
      %p85 = scmp.ne.s32.totalorder %s80, %s82
      %p86 = scmp.eq.s32.totalorder %s13, 0
      %p87 = por %p85, %p86
      %p88 = scmp.ne.s32.totalorder %s80, %s82
      %p89 = scmp.eq.s32.totalorder %s18, 3
      %p90 = por %p88, %p89
      %p91 = scmp.ne.s32.totalorder %s82, %s83
      %p92 = scmp.eq.s32.totalorder %s18, 0
      %p93 = por %p91, %p92
      %p94 = scmp.ne.s32.totalorder %s82, %s83
      %p95 = scmp.eq.s32.totalorder %s19, 3
      %p96 = por %p94, %p95
      %p98 = scmp.ne.s32.totalorder %s83, %s97
      %p99 = scmp.eq.s32.totalorder %s19, 0
      %p100 = por %p98, %p99
      %s102 = sadd.s32 %s101, 1
      %p105 = scmp.eq.s32.totalorder %s13, 3
      %p106 = scmp.ne.s32.totalorder %s101, %s103
      %p107 = scmp.eq.s32.totalorder %s13, 0
      %p108 = por %p106, %p107
      %p109 = scmp.ne.s32.totalorder %s101, %s103
      %p110 = scmp.eq.s32.totalorder %s18, 3
      %p111 = por %p109, %p110
      %p112 = scmp.ne.s32.totalorder %s103, %s104
      %p113 = scmp.eq.s32.totalorder %s18, 0
      %p114 = por %p112, %p113
      %p115 = scmp.ne.s32.totalorder %s103, %s104
      %p116 = scmp.eq.s32.totalorder %s19, 3
      %p117 = por %p115, %p116
      %p119 = scmp.ne.s32.totalorder %s104, %s118
      %p120 = scmp.eq.s32.totalorder %s19, 0
      %p121 = por %p119, %p120
      %s122 = ssub.s32 %s20, %s32
      %s123 = ssub.s32 %s21, %s28
      %s124 = sor.u32 %s122, %s123
      %p125 = scmp.eq.s32.totalorder %s124, 0
      %s127 = sadd.s32 %s126, 1
      %s128 = scalar_select %p125, %s126, %s127
      %p131 = pneg %p125
      %p132 = scmp.eq.s32.totalorder %s13, 3
      %p133 = por %p131, %p132
      %p134 = scmp.ne.s32.totalorder %s126, %s129
      %p135 = scmp.eq.s32.totalorder %s13, 0
      %p136 = por %p134, %p135
      %p137 = scmp.ne.s32.totalorder %s126, %s129
      %p138 = scmp.eq.s32.totalorder %s18, 3
      %p139 = por %p137, %p138
      %p140 = scmp.ne.s32.totalorder %s129, %s130
      %p141 = scmp.eq.s32.totalorder %s18, 0
      %p142 = por %p140, %p141
      %p143 = scmp.ne.s32.totalorder %s129, %s130
      %p144 = scmp.eq.s32.totalorder %s19, 3
      %p145 = por %p143, %p144
      %p147 = scmp.ne.s32.totalorder %s130, %s146
      %p148 = scmp.eq.s32.totalorder %s19, 0
      %p149 = por %p147, %p148
      %p150 = scmp.le.s32.totalorder 1, %s13
      %p151 = scmp.lt.s32.totalorder %s13, 5
      %p152 = pnand %p150, %p151
      %p153 = pneg %p152
      // Predicated region
      $region9: #{tpu_custom_call.1} parent=5 // pred_check
        _
      $region10: #{tpu_custom_call.1} parent=5 // pred_check_branch
        %155 = sbr.rel (%p152) target = $region12
      $region11: #{tpu_custom_call.1} parent=5 // pred_region
        %s156 = ssub.s32 %s13, 1
        // Predicated region
        $region13: #{tpu_custom_call.1} parent=11 // pred_check
          %p157 = pneg %p72
        $region14: #{tpu_custom_call.1} parent=11 // pred_check_branch
          %159 = sbr.rel (%p157) target = $region16
        $region15: #{tpu_custom_call.1} parent=11 // pred_region
          _
        $region16: #{tpu_custom_call.1} parent=11 // pred_fallthru
          _
        // Predicated region
        $region17: #{tpu_custom_call.1} parent=11 // pred_check
          %p160 = pneg %p93
        $region18: #{tpu_custom_call.1} parent=11 // pred_check_branch
          %162 = sbr.rel (%p160) target = $region20
        $region19: #{tpu_custom_call.1} parent=11 // pred_region
          _
        $region20: #{tpu_custom_call.1} parent=11 // pred_fallthru
          _
        // Predicated region
        $region21: #{tpu_custom_call.1} parent=11 // pred_check
          %p163 = pneg %p114
        $region22: #{tpu_custom_call.1} parent=11 // pred_check_branch
          %165 = sbr.rel (%p163) target = $region24
        $region23: #{tpu_custom_call.1} parent=11 // pred_region
          _
        $region24: #{tpu_custom_call.1} parent=11 // pred_fallthru
          _
      $region12: #{tpu_custom_call.1} parent=5 // pred_fallthru
        _
      %p166 = scmp.lt.s32.totalorder %s13, 4
      // Predicated region
      $region25: #{tpu_custom_call.1} parent=5 // pred_check
        %p167 = pneg %p166
      $region26: #{tpu_custom_call.1} parent=5 // pred_check_branch
        %169 = sbr.rel (%p167) target = $region28
      $region27: #{tpu_custom_call.1} parent=5 // pred_region
        // Predicated region
        $region29: #{tpu_custom_call.1} parent=27 // pred_check
          %p170 = pneg %p45
        $region30: #{tpu_custom_call.1} parent=27 // pred_check_branch
          %172 = sbr.rel (%p170) target = $region32
        $region31: #{tpu_custom_call.1} parent=27 // pred_region
          %p173 = scmp.lt.s32.totalorder %s20, 1
          %s174 = scalar_select %p173, %s20, 1
          %s175 = smul.addr %s174, 54
          %s176 = smul.addr %s175, 8
          %s177 = scalar_lea.vmem %s0, %s176
        $region32: #{tpu_custom_call.1} parent=27 // pred_fallthru
          _
      $region28: #{tpu_custom_call.1} parent=5 // pred_fallthru
        _
      %p178 = scmp.le.s32.totalorder 1, %s13
      %p179 = scmp.lt.s32.totalorder %s13, 5
      %p180 = pnand %p178, %p179
      %p181 = pneg %p180
      // Predicated region
      $region33: #{tpu_custom_call.1} parent=5 // pred_check
        _
      $region34: #{tpu_custom_call.1} parent=5 // pred_check_branch
        %183 = sbr.rel (%p180) target = $region36
      $region35: #{tpu_custom_call.1} parent=5 // pred_region
        %s184 = ssub.s32 %s13, 1
        %p185 = scmp.lt.s32.totalorder %s22, 1
        %s186 = scalar_select %p185, %s22, 1
        %s187 = smul.addr %s186, 54
        %s188 = smul.addr %s187, 8
        %s189 = scalar_lea.vmem %s0, %s188
        %p190 = pneg %p51
        %p191 = pneg %p48
        %p192 = pneg %p72
        %p193 = pneg %p69
        %p194 = pneg %p93
        %p195 = pneg %p90
        %p196 = pneg %p114
        %p197 = pneg %p111
        %p198 = pneg %p142
        %p199 = pneg %p139
        %s200 = sand.u32 %s129, 1
        %s201 = scalar_lea.sflag [#allocation3], %s200
        %s202 = sand.u32 %s129, 1
        %s203 = smul.addr %s202, 128
        %s204 = scalar_lea.vmem [#allocation2], %s203
        %p205 = scmp.lt.s32.totalorder %s22, 1
        %s206 = scalar_select %p205, %s22, 1
        %s207 = smul.addr %s206, 54
        %s208 = smul.addr %s207, 8
        %s209 = scalar_lea.vmem %s0, %s208
        %s210 = smul.u32 8, %s23
        %s211 = smul.u32 %s23, 8
        %s212 = smul.u32 %s211, 24
        %s213 = scalar_lea.vmem %s209, %s212
        %v214 = vld [vmem:[%s213] sm:$0xff]
        %v215 = vld [vmem:[%s213 + $0x8] sm:$0xff]
        %v216 = vld [vmem:[%s213 + $0x10] sm:$0x3]
        %v217 = vld [vmem:[%s213 + $0x18] sm:$0xff]
        %v218 = vld [vmem:[%s213 + $0x20] sm:$0xff]
        %v219 = vld [vmem:[%s213 + $0x28] sm:$0x3]
        %v220 = vld [vmem:[%s213 + $0x30] sm:$0xff]
        %v221 = vld [vmem:[%s213 + $0x38] sm:$0xff]
        %v222 = vld [vmem:[%s213 + $0x40] sm:$0x3]
        %v223 = vld [vmem:[%s213 + $0x48] sm:$0xff]
        %v224 = vld [vmem:[%s213 + $0x50] sm:$0xff]
        %v225 = vld [vmem:[%s213 + $0x58] sm:$0x3]
        %v226 = vld [vmem:[%s213 + $0x60] sm:$0xff]
        %v227 = vld [vmem:[%s213 + $0x68] sm:$0xff]
        %v228 = vld [vmem:[%s213 + $0x70] sm:$0x3]
        %v229 = vld [vmem:[%s213 + $0x78] sm:$0xff]
        %v230 = vld [vmem:[%s213 + $0x80] sm:$0xff]
        %v231 = vld [vmem:[%s213 + $0x88] sm:$0x3]
        %v232 = vld [vmem:[%s213 + $0x90] sm:$0xff]
        %v233 = vld [vmem:[%s213 + $0x98] sm:$0xff]
        %v234 = vld [vmem:[%s213 + $0xa0] sm:$0x3]
        %v235 = vld [vmem:[%s213 + $0xa8] sm:$0xff]
        %v236 = vld [vmem:[%s213 + $0xb0] sm:$0xff]
        %v237 = vld [vmem:[%s213 + $0xb8] sm:$0x3]
        %v238 = vld [vmem:[%s213 + $0xc0] sm:$0xff]
        %v239 = vld [vmem:[%s213 + $0xc8] sm:$0xff]
        %v240 = vld [vmem:[%s213 + $0xd0] sm:$0x3]
        %v241 = vld [vmem:[%s213 + $0xd8] sm:$0xff]
        %v242 = vld [vmem:[%s213 + $0xe0] sm:$0xff]
        %v243 = vld [vmem:[%s213 + $0xe8] sm:$0x3]
        %v244 = vld [vmem:[%s1] sm:$0xff]
        %v245 = vld [vmem:[%s1 + $0x8] sm:$0xff]
        %v246 = vld [vmem:[%s1 + $0x10] sm:$0xff]
        %v247 = vld [vmem:[%s1 + $0x18] sm:$0xff]
        %v248 = vld [vmem:[%s1 + $0x20] sm:$0xff]
        %v249 = vld [vmem:[%s1 + $0x28] sm:$0xff]
        %v250 = vld [vmem:[%s1 + $0x30] sm:$0xff]
        %v251 = vld [vmem:[%s1 + $0x38] sm:$0xff]
        %v252 = vld [vmem:[%s1 + $0x40] sm:$0xff]
        %v253 = vld [vmem:[%s1 + $0x48] sm:$0xff]
        %v254 = vld [vmem:[%s1 + $0x50] sm:$0xff]
        %v255 = vld [vmem:[%s1 + $0x58] sm:$0xff]
        %v256 = vld [vmem:[%s1 + $0x60] sm:$0xff]
        %v257 = vld [vmem:[%s1 + $0x68] sm:$0xff]
        %v258 = vld [vmem:[%s1 + $0x70] sm:$0xff]
        %v259 = vld [vmem:[%s1 + $0x78] sm:$0xff]
        %vm284 = vcmask 1046528
        %v285 = vrot.slane %v214, 1
        %v286 = vrot.slane %v215, 1
        %v287 = vsel %vm284, %v285, %v286
        %v288 = vrot.slane %v216, 1
        %v289 = vsel %vm284, %v286, %v288
        %v290 = vrot.slane %v217, 1
        %v291 = vrot.slane %v218, 1
        %v292 = vsel %vm284, %v290, %v291
        %v293 = vrot.slane %v219, 1
        %v294 = vsel %vm284, %v291, %v293
        %v295 = vrot.slane %v220, 1
        %v296 = vrot.slane %v221, 1
        %v297 = vsel %vm284, %v295, %v296
        %v298 = vrot.slane %v222, 1
        %v299 = vsel %vm284, %v296, %v298
        %v300 = vrot.slane %v223, 1
        %v301 = vrot.slane %v224, 1
        %v302 = vsel %vm284, %v300, %v301
        %v303 = vrot.slane %v225, 1
        %v304 = vsel %vm284, %v301, %v303
        %v305 = vrot.slane %v226, 1
        %v306 = vrot.slane %v227, 1
        %v307 = vsel %vm284, %v305, %v306
        %v308 = vrot.slane %v228, 1
        %v309 = vsel %vm284, %v306, %v308
        %v310 = vrot.slane %v229, 1
        %v311 = vrot.slane %v230, 1
        %v312 = vsel %vm284, %v310, %v311
        %v313 = vrot.slane %v231, 1
        %v314 = vsel %vm284, %v311, %v313
        %v315 = vrot.slane %v232, 1
        %v316 = vrot.slane %v233, 1
        %v317 = vsel %vm284, %v315, %v316
        %v318 = vrot.slane %v234, 1
        %v319 = vsel %vm284, %v316, %v318
        %v320 = vrot.slane %v235, 1
        %v321 = vrot.slane %v236, 1
        %v322 = vsel %vm284, %v320, %v321
        %v323 = vrot.slane %v237, 1
        %v324 = vsel %vm284, %v321, %v323
        %s341 = scalar_lea.vmem %s1, 128
        %v342 = vld [vmem:[%s341] sm:$0xff]
        %v343 = vld [vmem:[%s341 + $0x8] sm:$0xff]
        %v344 = vld [vmem:[%s341 + $0x10] sm:$0xff]
        %v345 = vld [vmem:[%s341 + $0x18] sm:$0xff]
        %v346 = vld [vmem:[%s341 + $0x20] sm:$0xff]
        %v347 = vld [vmem:[%s341 + $0x28] sm:$0xff]
        %v348 = vld [vmem:[%s341 + $0x30] sm:$0xff]
        %v349 = vld [vmem:[%s341 + $0x38] sm:$0xff]
        %v350 = vld [vmem:[%s341 + $0x40] sm:$0xff]
        %v351 = vld [vmem:[%s341 + $0x48] sm:$0xff]
        %v352 = vld [vmem:[%s341 + $0x50] sm:$0xff]
        %v353 = vld [vmem:[%s341 + $0x58] sm:$0xff]
        %v354 = vld [vmem:[%s341 + $0x60] sm:$0xff]
        %v355 = vld [vmem:[%s341 + $0x68] sm:$0xff]
        %v356 = vld [vmem:[%s341 + $0x70] sm:$0xff]
        %v357 = vld [vmem:[%s341 + $0x78] sm:$0xff]
        %358 = vmatprep.subr.mxu0 0.0
        %359 = vmatpush1.msra.mxu0 %v357
        %360 = vmatprep.subr.mxu0 0.0
        %361 = vmatpush1.msra.mxu0 %v356
        %362 = vmatprep.subr.mxu0 0.0
        %363 = vmatpush1.msra.mxu0 %v355
        %364 = vmatprep.subr.mxu0 0.0
        %365 = vmatpush1.msra.mxu0 %v354
        %366 = vmatprep.subr.mxu0 0.0
        %367 = vmatpush1.msra.mxu0 %v353
        %368 = vmatprep.subr.mxu0 0.0
        %369 = vmatpush1.msra.mxu0 %v352
        %370 = vmatprep.subr.mxu0 0.0
        %371 = vmatpush1.msra.mxu0 %v351
        %372 = vmatprep.subr.mxu0 0.0
        %373 = vmatpush1.msra.mxu0 %v350
        %374 = vmatprep.subr.mxu0 0.0
        %375 = vmatpush1.msra.mxu0 %v349
        %376 = vmatprep.subr.mxu0 0.0
        %377 = vmatpush1.msra.mxu0 %v348
        %378 = vmatprep.subr.mxu0 0.0
        %379 = vmatpush1.msra.mxu0 %v347
        %380 = vmatprep.subr.mxu0 0.0
        %381 = vmatpush1.msra.mxu0 %v346
        %382 = vmatprep.subr.mxu0 0.0
        %383 = vmatpush1.msra.mxu0 %v345
        %384 = vmatprep.subr.mxu0 0.0
        %385 = vmatpush1.msra.mxu0 %v344
        %386 = vmatprep.subr.mxu0 0.0
        %387 = vmatpush1.msra.mxu0 %v343
        %388 = vmatprep.subr.mxu0 0.0
        %389 = vmatpush1.msra.mxu0 %v342
        %390 = vmatprep.subr.mxu0 0.0
        %391 = vmatpush2.msra.mxu0 0.0
        %392 = vmatprep.subr.mxu0 0.0
        %393 = vmatpush2.msra.mxu0 0.0
        %394 = vmatprep.subr.mxu0 0.0
        %395 = vmatpush2.msra.mxu0 0.0
        %396 = vmatprep.subr.mxu0 0.0
        %397 = vmatpush2.msra.mxu0 0.0
        %398 = vmatprep.subr.mxu0 0.0
        %399 = vmatpush2.msra.mxu0 0.0
        %400 = vmatprep.subr.mxu0 0.0
        %401 = vmatpush2.msra.mxu0 0.0
        %402 = vmatprep.subr.mxu0 0.0
        %403 = vmatpush2.msra.mxu0 0.0
        %404 = vmatprep.subr.mxu0 0.0
        %405 = vmatpush2.msra.mxu0 0.0
        %406 = vmatprep.subr.mxu0 0.0
        %407 = vmatpush2.msra.mxu0 0.0
        %408 = vmatprep.subr.mxu0 0.0
        %409 = vmatpush2.msra.mxu0 0.0
        %410 = vmatprep.subr.mxu0 0.0
        %411 = vmatpush2.msra.mxu0 0.0
        %412 = vmatprep.subr.mxu0 0.0
        %413 = vmatpush2.msra.mxu0 0.0
        %414 = vmatprep.subr.mxu0 0.0
        %415 = vmatpush2.msra.mxu0 0.0
        %416 = vmatprep.subr.mxu0 0.0
        %417 = vmatpush2.msra.mxu0 0.0
        %418 = vmatprep.subr.mxu0 0.0
        %419 = vmatpush2.msra.mxu0 0.0
        %420 = vmatprep.subr.mxu0 0.0
        %421 = vmatpush2.msra.mxu0 0.0
        %422 = vmatprep.mubr.f32.mxu0 0.0
        %423 = vmatmul.mubr.f32.gmra.mxu0 %v287
        %v424 = vpop.f32.mrf.mxu0
        %v425 = vadd.f32 0.0, %v424
        %v426 = vpop.f32.mrf.mxu0
        %427 = vmatprep.mubr.f32.mxu0 0.0
        %428 = vmatmul.mubr.f32.gmra.mxu0 %v289
        %v429 = vpop.f32.mrf.mxu0
        %v430 = vadd.f32 0.0, %v429
        %v431 = vpop.f32.mrf.mxu0
        %432 = vmatprep.mubr.f32.mxu0 0.0
        %433 = vmatmul.mubr.f32.gmra.mxu0 %v292
        %v434 = vpop.f32.mrf.mxu0
        %v435 = vadd.f32 0.0, %v434
        %v436 = vpop.f32.mrf.mxu0
        %437 = vmatprep.mubr.f32.mxu0 0.0
        %438 = vmatmul.mubr.f32.gmra.mxu0 %v294
        %v439 = vpop.f32.mrf.mxu0
        %v440 = vadd.f32 0.0, %v439
        %v441 = vpop.f32.mrf.mxu0
        %442 = vmatprep.mubr.f32.mxu0 0.0
        %443 = vmatmul.mubr.f32.gmra.mxu0 %v297
        %v444 = vpop.f32.mrf.mxu0
        %v445 = vadd.f32 0.0, %v444
        %v446 = vpop.f32.mrf.mxu0
        %447 = vmatprep.mubr.f32.mxu0 0.0
        %448 = vmatmul.mubr.f32.gmra.mxu0 %v299
        %v449 = vpop.f32.mrf.mxu0
        %v450 = vadd.f32 0.0, %v449
        %v451 = vpop.f32.mrf.mxu0
        %452 = vmatprep.mubr.f32.mxu0 0.0
        %453 = vmatmul.mubr.f32.gmra.mxu0 %v302
        %v454 = vpop.f32.mrf.mxu0
        %v455 = vadd.f32 0.0, %v454
        %v456 = vpop.f32.mrf.mxu0
        %457 = vmatprep.mubr.f32.mxu0 0.0
        %458 = vmatmul.mubr.f32.gmra.mxu0 %v304
        %v459 = vpop.f32.mrf.mxu0
        %v460 = vadd.f32 0.0, %v459
        %v461 = vpop.f32.mrf.mxu0
        %462 = vmatprep.mubr.f32.mxu0 0.0
        %463 = vmatmul.mubr.f32.gmra.mxu0 %v307
        %v464 = vpop.f32.mrf.mxu0
        %v465 = vadd.f32 0.0, %v464
        %v466 = vpop.f32.mrf.mxu0
        %467 = vmatprep.mubr.f32.mxu0 0.0
        %468 = vmatmul.mubr.f32.gmra.mxu0 %v309
        %v469 = vpop.f32.mrf.mxu0
        %v470 = vadd.f32 0.0, %v469
        %v471 = vpop.f32.mrf.mxu0
        %472 = vmatprep.mubr.f32.mxu0 0.0
        %473 = vmatmul.mubr.f32.gmra.mxu0 %v312
        %v474 = vpop.f32.mrf.mxu0
        %v475 = vadd.f32 0.0, %v474
        %v476 = vpop.f32.mrf.mxu0
        %477 = vmatprep.mubr.f32.mxu0 0.0
        %478 = vmatmul.mubr.f32.gmra.mxu0 %v314
        %v479 = vpop.f32.mrf.mxu0
        %v480 = vadd.f32 0.0, %v479
        %v481 = vpop.f32.mrf.mxu0
        %482 = vmatprep.mubr.f32.mxu0 0.0
        %483 = vmatmul.mubr.f32.gmra.mxu0 %v317
        %v484 = vpop.f32.mrf.mxu0
        %v485 = vadd.f32 0.0, %v484
        %v486 = vpop.f32.mrf.mxu0
        %487 = vmatprep.mubr.f32.mxu0 0.0
        %488 = vmatmul.mubr.f32.gmra.mxu0 %v319
        %v489 = vpop.f32.mrf.mxu0
        %v490 = vadd.f32 0.0, %v489
        %v491 = vpop.f32.mrf.mxu0
        %492 = vmatprep.mubr.f32.mxu0 0.0
        %493 = vmatmul.mubr.f32.gmra.mxu0 %v322
        %v494 = vpop.f32.mrf.mxu0
        %v495 = vadd.f32 0.0, %v494
        %v496 = vpop.f32.mrf.mxu0
        %497 = vmatprep.mubr.f32.mxu0 0.0
        %498 = vmatmul.mubr.f32.gmra.mxu0 %v324
        %v499 = vpop.f32.mrf.mxu0
        %v500 = vadd.f32 0.0, %v499
        %v501 = vpop.f32.mrf.mxu0
        %502 = vdwg.mxu0
        %503 = vmatprep.subr.mxu0 0.0
        %504 = vmatpush1.msra.mxu0 %v259
        %505 = vmatprep.subr.mxu0 0.0
        %506 = vmatpush1.msra.mxu0 %v258
        %507 = vmatprep.subr.mxu0 0.0
        %508 = vmatpush1.msra.mxu0 %v257
        %509 = vmatprep.subr.mxu0 0.0
        %510 = vmatpush1.msra.mxu0 %v256
        %511 = vmatprep.subr.mxu0 0.0
        %512 = vmatpush1.msra.mxu0 %v255
        %513 = vmatprep.subr.mxu0 0.0
        %514 = vmatpush1.msra.mxu0 %v254
        %515 = vmatprep.subr.mxu0 0.0
        %516 = vmatpush1.msra.mxu0 %v253
        %517 = vmatprep.subr.mxu0 0.0
        %518 = vmatpush1.msra.mxu0 %v252
        %519 = vmatprep.subr.mxu0 0.0
        %520 = vmatpush1.msra.mxu0 %v251
        %521 = vmatprep.subr.mxu0 0.0
        %522 = vmatpush1.msra.mxu0 %v250
        %523 = vmatprep.subr.mxu0 0.0
        %524 = vmatpush1.msra.mxu0 %v249
        %525 = vmatprep.subr.mxu0 0.0
        %526 = vmatpush1.msra.mxu0 %v248
        %527 = vmatprep.subr.mxu0 0.0
        %528 = vmatpush1.msra.mxu0 %v247
        %529 = vmatprep.subr.mxu0 0.0
        %530 = vmatpush1.msra.mxu0 %v246
        %531 = vmatprep.subr.mxu0 0.0
        %532 = vmatpush1.msra.mxu0 %v245
        %533 = vmatprep.subr.mxu0 0.0
        %534 = vmatpush1.msra.mxu0 %v244
        %535 = vmatprep.subr.mxu0 0.0
        %536 = vmatpush2.msra.mxu0 0.0
        %537 = vmatprep.subr.mxu0 0.0
        %538 = vmatpush2.msra.mxu0 0.0
        %539 = vmatprep.subr.mxu0 0.0
        %540 = vmatpush2.msra.mxu0 0.0
        %541 = vmatprep.subr.mxu0 0.0
        %542 = vmatpush2.msra.mxu0 0.0
        %543 = vmatprep.subr.mxu0 0.0
        %544 = vmatpush2.msra.mxu0 0.0
        %545 = vmatprep.subr.mxu0 0.0
        %546 = vmatpush2.msra.mxu0 0.0
        %547 = vmatprep.subr.mxu0 0.0
        %548 = vmatpush2.msra.mxu0 0.0
        %549 = vmatprep.subr.mxu0 0.0
        %550 = vmatpush2.msra.mxu0 0.0
        %551 = vmatprep.subr.mxu0 0.0
        %552 = vmatpush2.msra.mxu0 0.0
        %553 = vmatprep.subr.mxu0 0.0
        %554 = vmatpush2.msra.mxu0 0.0
        %555 = vmatprep.subr.mxu0 0.0
        %556 = vmatpush2.msra.mxu0 0.0
        %557 = vmatprep.subr.mxu0 0.0
        %558 = vmatpush2.msra.mxu0 0.0
        %559 = vmatprep.subr.mxu0 0.0
        %560 = vmatpush2.msra.mxu0 0.0
        %561 = vmatprep.subr.mxu0 0.0
        %562 = vmatpush2.msra.mxu0 0.0
        %563 = vmatprep.subr.mxu0 0.0
        %564 = vmatpush2.msra.mxu0 0.0
        %565 = vmatprep.subr.mxu0 0.0
        %566 = vmatpush2.msra.mxu0 0.0
        %567 = vmatprep.mubr.f32.mxu0 0.0
        %568 = vmatmul.mubr.f32.gmra.mxu0 %v214
        %v569 = vpop.f32.mrf.mxu0
        %v570 = vadd.f32 %v425, %v569
        %v571 = vpop.f32.mrf.mxu0
        %572 = vmatprep.mubr.f32.mxu0 0.0
        %573 = vmatmul.mubr.f32.gmra.mxu0 %v215
        %v574 = vpop.f32.mrf.mxu0
        %v575 = vadd.f32 %v430, %v574
        %v576 = vpop.f32.mrf.mxu0
        %577 = vmatprep.mubr.f32.mxu0 0.0
        %578 = vmatmul.mubr.f32.gmra.mxu0 %v217
        %v579 = vpop.f32.mrf.mxu0
        %v580 = vadd.f32 %v435, %v579
        %v581 = vpop.f32.mrf.mxu0
        %582 = vmatprep.mubr.f32.mxu0 0.0
        %583 = vmatmul.mubr.f32.gmra.mxu0 %v218
        %v584 = vpop.f32.mrf.mxu0
        %v585 = vadd.f32 %v440, %v584
        %v586 = vpop.f32.mrf.mxu0
        %587 = vmatprep.mubr.f32.mxu0 0.0
        %588 = vmatmul.mubr.f32.gmra.mxu0 %v220
        %v589 = vpop.f32.mrf.mxu0
        %v590 = vadd.f32 %v445, %v589
        %v591 = vpop.f32.mrf.mxu0
        %592 = vmatprep.mubr.f32.mxu0 0.0
        %593 = vmatmul.mubr.f32.gmra.mxu0 %v221
        %v594 = vpop.f32.mrf.mxu0
        %v595 = vadd.f32 %v450, %v594
        %v596 = vpop.f32.mrf.mxu0
        %597 = vmatprep.mubr.f32.mxu0 0.0
        %598 = vmatmul.mubr.f32.gmra.mxu0 %v223
        %v599 = vpop.f32.mrf.mxu0
        %v600 = vadd.f32 %v455, %v599
        %v601 = vpop.f32.mrf.mxu0
        %602 = vmatprep.mubr.f32.mxu0 0.0
        %603 = vmatmul.mubr.f32.gmra.mxu0 %v224
        %v604 = vpop.f32.mrf.mxu0
        %v605 = vadd.f32 %v460, %v604
        %v606 = vpop.f32.mrf.mxu0
        %607 = vmatprep.mubr.f32.mxu0 0.0
        %608 = vmatmul.mubr.f32.gmra.mxu0 %v226
        %v609 = vpop.f32.mrf.mxu0
        %v610 = vadd.f32 %v465, %v609
        %v611 = vpop.f32.mrf.mxu0
        %612 = vmatprep.mubr.f32.mxu0 0.0
        %613 = vmatmul.mubr.f32.gmra.mxu0 %v227
        %v614 = vpop.f32.mrf.mxu0
        %v615 = vadd.f32 %v470, %v614
        %v616 = vpop.f32.mrf.mxu0
        %617 = vmatprep.mubr.f32.mxu0 0.0
        %618 = vmatmul.mubr.f32.gmra.mxu0 %v229
        %v619 = vpop.f32.mrf.mxu0
        %v620 = vadd.f32 %v475, %v619
        %v621 = vpop.f32.mrf.mxu0
        %622 = vmatprep.mubr.f32.mxu0 0.0
        %623 = vmatmul.mubr.f32.gmra.mxu0 %v230
        %v624 = vpop.f32.mrf.mxu0
        %v625 = vadd.f32 %v480, %v624
        %v626 = vpop.f32.mrf.mxu0
        %627 = vmatprep.mubr.f32.mxu0 0.0
        %628 = vmatmul.mubr.f32.gmra.mxu0 %v232
        %v629 = vpop.f32.mrf.mxu0
        %v630 = vadd.f32 %v485, %v629
        %v631 = vpop.f32.mrf.mxu0
        %632 = vmatprep.mubr.f32.mxu0 0.0
        %633 = vmatmul.mubr.f32.gmra.mxu0 %v233
        %v634 = vpop.f32.mrf.mxu0
        %v635 = vadd.f32 %v490, %v634
        %v636 = vpop.f32.mrf.mxu0
        %637 = vmatprep.mubr.f32.mxu0 0.0
        %638 = vmatmul.mubr.f32.gmra.mxu0 %v235
        %v639 = vpop.f32.mrf.mxu0
        %v640 = vadd.f32 %v495, %v639
        %v641 = vpop.f32.mrf.mxu0
        %642 = vmatprep.mubr.f32.mxu0 0.0
        %643 = vmatmul.mubr.f32.gmra.mxu0 %v236
        %v644 = vpop.f32.mrf.mxu0
        %v645 = vadd.f32 %v500, %v644
        %v646 = vpop.f32.mrf.mxu0
        %647 = vdwg.mxu0
        %vm648 = vcmask 1045504
        %v649 = vrot.slane %v214, 2
        %v650 = vrot.slane %v215, 2
        %v651 = vsel %vm648, %v649, %v650
        %v652 = vrot.slane %v216, 2
        %v653 = vsel %vm648, %v650, %v652
        %v654 = vrot.slane %v217, 2
        %v655 = vrot.slane %v218, 2
        %v656 = vsel %vm648, %v654, %v655
        %v657 = vrot.slane %v219, 2
        %v658 = vsel %vm648, %v655, %v657
        %v659 = vrot.slane %v220, 2
        %v660 = vrot.slane %v221, 2
        %v661 = vsel %vm648, %v659, %v660
        %v662 = vrot.slane %v222, 2
        %v663 = vsel %vm648, %v660, %v662
        %v664 = vrot.slane %v223, 2
        %v665 = vrot.slane %v224, 2
        %v666 = vsel %vm648, %v664, %v665
        %v667 = vrot.slane %v225, 2
        %v668 = vsel %vm648, %v665, %v667
        %v669 = vrot.slane %v226, 2
        %v670 = vrot.slane %v227, 2
        %v671 = vsel %vm648, %v669, %v670
        %v672 = vrot.slane %v228, 2
        %v673 = vsel %vm648, %v670, %v672
        %v674 = vrot.slane %v229, 2
        %v675 = vrot.slane %v230, 2
        %v676 = vsel %vm648, %v674, %v675
        %v677 = vrot.slane %v231, 2
        %v678 = vsel %vm648, %v675, %v677
        %v679 = vrot.slane %v232, 2
        %v680 = vrot.slane %v233, 2
        %v681 = vsel %vm648, %v679, %v680
        %v682 = vrot.slane %v234, 2
        %v683 = vsel %vm648, %v680, %v682
        %v684 = vrot.slane %v235, 2
        %v685 = vrot.slane %v236, 2
        %v686 = vsel %vm648, %v684, %v685
        %v687 = vrot.slane %v237, 2
        %v688 = vsel %vm648, %v685, %v687
        %s705 = scalar_lea.vmem %s1, 256
        %v706 = vld [vmem:[%s705] sm:$0xff]
        %v707 = vld [vmem:[%s705 + $0x8] sm:$0xff]
        %v708 = vld [vmem:[%s705 + $0x10] sm:$0xff]
        %v709 = vld [vmem:[%s705 + $0x18] sm:$0xff]
        %v710 = vld [vmem:[%s705 + $0x20] sm:$0xff]
        %v711 = vld [vmem:[%s705 + $0x28] sm:$0xff]
        %v712 = vld [vmem:[%s705 + $0x30] sm:$0xff]
        %v713 = vld [vmem:[%s705 + $0x38] sm:$0xff]
        %v714 = vld [vmem:[%s705 + $0x40] sm:$0xff]
        %v715 = vld [vmem:[%s705 + $0x48] sm:$0xff]
        %v716 = vld [vmem:[%s705 + $0x50] sm:$0xff]
        %v717 = vld [vmem:[%s705 + $0x58] sm:$0xff]
        %v718 = vld [vmem:[%s705 + $0x60] sm:$0xff]
        %v719 = vld [vmem:[%s705 + $0x68] sm:$0xff]
        %v720 = vld [vmem:[%s705 + $0x70] sm:$0xff]
        %v721 = vld [vmem:[%s705 + $0x78] sm:$0xff]
        %722 = vmatprep.subr.mxu0 0.0
        %723 = vmatpush1.msra.mxu0 %v721
        %724 = vmatprep.subr.mxu0 0.0
        %725 = vmatpush1.msra.mxu0 %v720
        %726 = vmatprep.subr.mxu0 0.0
        %727 = vmatpush1.msra.mxu0 %v719
        %728 = vmatprep.subr.mxu0 0.0
        %729 = vmatpush1.msra.mxu0 %v718
        %730 = vmatprep.subr.mxu0 0.0
        %731 = vmatpush1.msra.mxu0 %v717
        %732 = vmatprep.subr.mxu0 0.0
        %733 = vmatpush1.msra.mxu0 %v716
        %734 = vmatprep.subr.mxu0 0.0
        %735 = vmatpush1.msra.mxu0 %v715
        %736 = vmatprep.subr.mxu0 0.0
        %737 = vmatpush1.msra.mxu0 %v714
        %738 = vmatprep.subr.mxu0 0.0
        %739 = vmatpush1.msra.mxu0 %v713
        %740 = vmatprep.subr.mxu0 0.0
        %741 = vmatpush1.msra.mxu0 %v712
        %742 = vmatprep.subr.mxu0 0.0
        %743 = vmatpush1.msra.mxu0 %v711
        %744 = vmatprep.subr.mxu0 0.0
        %745 = vmatpush1.msra.mxu0 %v710
        %746 = vmatprep.subr.mxu0 0.0
        %747 = vmatpush1.msra.mxu0 %v709
        %748 = vmatprep.subr.mxu0 0.0
        %749 = vmatpush1.msra.mxu0 %v708
        %750 = vmatprep.subr.mxu0 0.0
        %751 = vmatpush1.msra.mxu0 %v707
        %752 = vmatprep.subr.mxu0 0.0
        %753 = vmatpush1.msra.mxu0 %v706
        %754 = vmatprep.subr.mxu0 0.0
        %755 = vmatpush2.msra.mxu0 0.0
        %756 = vmatprep.subr.mxu0 0.0
        %757 = vmatpush2.msra.mxu0 0.0
        %758 = vmatprep.subr.mxu0 0.0
        %759 = vmatpush2.msra.mxu0 0.0
        %760 = vmatprep.subr.mxu0 0.0
        %761 = vmatpush2.msra.mxu0 0.0
        %762 = vmatprep.subr.mxu0 0.0
        %763 = vmatpush2.msra.mxu0 0.0
        %764 = vmatprep.subr.mxu0 0.0
        %765 = vmatpush2.msra.mxu0 0.0
        %766 = vmatprep.subr.mxu0 0.0
        %767 = vmatpush2.msra.mxu0 0.0
        %768 = vmatprep.subr.mxu0 0.0
        %769 = vmatpush2.msra.mxu0 0.0
        %770 = vmatprep.subr.mxu0 0.0
        %771 = vmatpush2.msra.mxu0 0.0
        %772 = vmatprep.subr.mxu0 0.0
        %773 = vmatpush2.msra.mxu0 0.0
        %774 = vmatprep.subr.mxu0 0.0
        %775 = vmatpush2.msra.mxu0 0.0
        %776 = vmatprep.subr.mxu0 0.0
        %777 = vmatpush2.msra.mxu0 0.0
        %778 = vmatprep.subr.mxu0 0.0
        %779 = vmatpush2.msra.mxu0 0.0
        %780 = vmatprep.subr.mxu0 0.0
        %781 = vmatpush2.msra.mxu0 0.0
        %782 = vmatprep.subr.mxu0 0.0
        %783 = vmatpush2.msra.mxu0 0.0
        %784 = vmatprep.subr.mxu0 0.0
        %785 = vmatpush2.msra.mxu0 0.0
        %786 = vmatprep.mubr.f32.mxu0 0.0
        %787 = vmatmul.mubr.f32.gmra.mxu0 %v651
        %v788 = vpop.f32.mrf.mxu0
        %v789 = vadd.f32 0.0, %v788
        %v790 = vpop.f32.mrf.mxu0
        %791 = vmatprep.mubr.f32.mxu0 0.0
        %792 = vmatmul.mubr.f32.gmra.mxu0 %v653
        %v793 = vpop.f32.mrf.mxu0
        %v794 = vadd.f32 0.0, %v793
        %v795 = vpop.f32.mrf.mxu0
        %796 = vmatprep.mubr.f32.mxu0 0.0
        %797 = vmatmul.mubr.f32.gmra.mxu0 %v656
        %v798 = vpop.f32.mrf.mxu0
        %v799 = vadd.f32 0.0, %v798
        %v800 = vpop.f32.mrf.mxu0
        %801 = vmatprep.mubr.f32.mxu0 0.0
        %802 = vmatmul.mubr.f32.gmra.mxu0 %v658
        %v803 = vpop.f32.mrf.mxu0
        %v804 = vadd.f32 0.0, %v803
        %v805 = vpop.f32.mrf.mxu0
        %806 = vmatprep.mubr.f32.mxu0 0.0
        %807 = vmatmul.mubr.f32.gmra.mxu0 %v661
        %v808 = vpop.f32.mrf.mxu0
        %v809 = vadd.f32 0.0, %v808
        %v810 = vpop.f32.mrf.mxu0
        %811 = vmatprep.mubr.f32.mxu0 0.0
        %812 = vmatmul.mubr.f32.gmra.mxu0 %v663
        %v813 = vpop.f32.mrf.mxu0
        %v814 = vadd.f32 0.0, %v813
        %v815 = vpop.f32.mrf.mxu0
        %816 = vmatprep.mubr.f32.mxu0 0.0
        %817 = vmatmul.mubr.f32.gmra.mxu0 %v666
        %v818 = vpop.f32.mrf.mxu0
        %v819 = vadd.f32 0.0, %v818
        %v820 = vpop.f32.mrf.mxu0
        %821 = vmatprep.mubr.f32.mxu0 0.0
        %822 = vmatmul.mubr.f32.gmra.mxu0 %v668
        %v823 = vpop.f32.mrf.mxu0
        %v824 = vadd.f32 0.0, %v823
        %v825 = vpop.f32.mrf.mxu0
        %826 = vmatprep.mubr.f32.mxu0 0.0
        %827 = vmatmul.mubr.f32.gmra.mxu0 %v671
        %v828 = vpop.f32.mrf.mxu0
        %v829 = vadd.f32 0.0, %v828
        %v830 = vpop.f32.mrf.mxu0
        %831 = vmatprep.mubr.f32.mxu0 0.0
        %832 = vmatmul.mubr.f32.gmra.mxu0 %v673
        %v833 = vpop.f32.mrf.mxu0
        %v834 = vadd.f32 0.0, %v833
        %v835 = vpop.f32.mrf.mxu0
        %836 = vmatprep.mubr.f32.mxu0 0.0
        %837 = vmatmul.mubr.f32.gmra.mxu0 %v676
        %v838 = vpop.f32.mrf.mxu0
        %v839 = vadd.f32 0.0, %v838
        %v840 = vpop.f32.mrf.mxu0
        %841 = vmatprep.mubr.f32.mxu0 0.0
        %842 = vmatmul.mubr.f32.gmra.mxu0 %v678
        %v843 = vpop.f32.mrf.mxu0
        %v844 = vadd.f32 0.0, %v843
        %v845 = vpop.f32.mrf.mxu0
        %846 = vmatprep.mubr.f32.mxu0 0.0
        %847 = vmatmul.mubr.f32.gmra.mxu0 %v681
        %v848 = vpop.f32.mrf.mxu0
        %v849 = vadd.f32 0.0, %v848
        %v850 = vpop.f32.mrf.mxu0
        %851 = vmatprep.mubr.f32.mxu0 0.0
        %852 = vmatmul.mubr.f32.gmra.mxu0 %v683
        %v853 = vpop.f32.mrf.mxu0
        %v854 = vadd.f32 0.0, %v853
        %v855 = vpop.f32.mrf.mxu0
        %856 = vmatprep.mubr.f32.mxu0 0.0
        %857 = vmatmul.mubr.f32.gmra.mxu0 %v686
        %v858 = vpop.f32.mrf.mxu0
        %v859 = vadd.f32 0.0, %v858
        %v860 = vpop.f32.mrf.mxu0
        %861 = vmatprep.mubr.f32.mxu0 0.0
        %862 = vmatmul.mubr.f32.gmra.mxu0 %v688
        %v863 = vpop.f32.mrf.mxu0
        %v864 = vadd.f32 0.0, %v863
        %v865 = vpop.f32.mrf.mxu0
        %866 = vdwg.mxu0
        %v867 = vadd.f32 %v570, %v789
        %v868 = vadd.f32 %v575, %v794
        %v869 = vadd.f32 %v580, %v799
        %v870 = vadd.f32 %v585, %v804
        %v871 = vadd.f32 %v590, %v809
        %v872 = vadd.f32 %v595, %v814
        %v873 = vadd.f32 %v600, %v819
        %v874 = vadd.f32 %v605, %v824
        %v875 = vadd.f32 %v610, %v829
        %v876 = vadd.f32 %v615, %v834
        %v877 = vadd.f32 %v620, %v839
        %v878 = vadd.f32 %v625, %v844
        %v879 = vadd.f32 %v630, %v849
        %v880 = vadd.f32 %v635, %v854
        %v881 = vadd.f32 %v640, %v859
        %v882 = vadd.f32 %v645, %v864
        %s883 = scalar_lea.vmem %s1, 384
        %v884 = vld [vmem:[%s883] sm:$0xff]
        %v885 = vld [vmem:[%s883 + $0x8] sm:$0xff]
        %v886 = vld [vmem:[%s883 + $0x10] sm:$0xff]
        %v887 = vld [vmem:[%s883 + $0x18] sm:$0xff]
        %v888 = vld [vmem:[%s883 + $0x20] sm:$0xff]
        %v889 = vld [vmem:[%s883 + $0x28] sm:$0xff]
        %v890 = vld [vmem:[%s883 + $0x30] sm:$0xff]
        %v891 = vld [vmem:[%s883 + $0x38] sm:$0xff]
        %v892 = vld [vmem:[%s883 + $0x40] sm:$0xff]
        %v893 = vld [vmem:[%s883 + $0x48] sm:$0xff]
        %v894 = vld [vmem:[%s883 + $0x50] sm:$0xff]
        %v895 = vld [vmem:[%s883 + $0x58] sm:$0xff]
        %v896 = vld [vmem:[%s883 + $0x60] sm:$0xff]
        %v897 = vld [vmem:[%s883 + $0x68] sm:$0xff]
        %v898 = vld [vmem:[%s883 + $0x70] sm:$0xff]
        %v899 = vld [vmem:[%s883 + $0x78] sm:$0xff]
        %900 = vmatprep.subr.mxu0 0.0
        %901 = vmatpush1.msra.mxu0 %v899
        %902 = vmatprep.subr.mxu0 0.0
        %903 = vmatpush1.msra.mxu0 %v898
        %904 = vmatprep.subr.mxu0 0.0
        %905 = vmatpush1.msra.mxu0 %v897
        %906 = vmatprep.subr.mxu0 0.0
        %907 = vmatpush1.msra.mxu0 %v896
        %908 = vmatprep.subr.mxu0 0.0
        %909 = vmatpush1.msra.mxu0 %v895
        %910 = vmatprep.subr.mxu0 0.0
        %911 = vmatpush1.msra.mxu0 %v894
        %912 = vmatprep.subr.mxu0 0.0
        %913 = vmatpush1.msra.mxu0 %v893
        %914 = vmatprep.subr.mxu0 0.0
        %915 = vmatpush1.msra.mxu0 %v892
        %916 = vmatprep.subr.mxu0 0.0
        %917 = vmatpush1.msra.mxu0 %v891
        %918 = vmatprep.subr.mxu0 0.0
        %919 = vmatpush1.msra.mxu0 %v890
        %920 = vmatprep.subr.mxu0 0.0
        %921 = vmatpush1.msra.mxu0 %v889
        %922 = vmatprep.subr.mxu0 0.0
        %923 = vmatpush1.msra.mxu0 %v888
        %924 = vmatprep.subr.mxu0 0.0
        %925 = vmatpush1.msra.mxu0 %v887
        %926 = vmatprep.subr.mxu0 0.0
        %927 = vmatpush1.msra.mxu0 %v886
        %928 = vmatprep.subr.mxu0 0.0
        %929 = vmatpush1.msra.mxu0 %v885
        %930 = vmatprep.subr.mxu0 0.0
        %931 = vmatpush1.msra.mxu0 %v884
        %932 = vmatprep.subr.mxu0 0.0
        %933 = vmatpush2.msra.mxu0 0.0
        %934 = vmatprep.subr.mxu0 0.0
        %935 = vmatpush2.msra.mxu0 0.0
        %936 = vmatprep.subr.mxu0 0.0
        %937 = vmatpush2.msra.mxu0 0.0
        %938 = vmatprep.subr.mxu0 0.0
        %939 = vmatpush2.msra.mxu0 0.0
        %940 = vmatprep.subr.mxu0 0.0
        %941 = vmatpush2.msra.mxu0 0.0
        %942 = vmatprep.subr.mxu0 0.0
        %943 = vmatpush2.msra.mxu0 0.0
        %944 = vmatprep.subr.mxu0 0.0
        %945 = vmatpush2.msra.mxu0 0.0
        %946 = vmatprep.subr.mxu0 0.0
        %947 = vmatpush2.msra.mxu0 0.0
        %948 = vmatprep.subr.mxu0 0.0
        %949 = vmatpush2.msra.mxu0 0.0
        %950 = vmatprep.subr.mxu0 0.0
        %951 = vmatpush2.msra.mxu0 0.0
        %952 = vmatprep.subr.mxu0 0.0
        %953 = vmatpush2.msra.mxu0 0.0
        %954 = vmatprep.subr.mxu0 0.0
        %955 = vmatpush2.msra.mxu0 0.0
        %956 = vmatprep.subr.mxu0 0.0
        %957 = vmatpush2.msra.mxu0 0.0
        %958 = vmatprep.subr.mxu0 0.0
        %959 = vmatpush2.msra.mxu0 0.0
        %960 = vmatprep.subr.mxu0 0.0
        %961 = vmatpush2.msra.mxu0 0.0
        %962 = vmatprep.subr.mxu0 0.0
        %963 = vmatpush2.msra.mxu0 0.0
        %964 = vmatprep.mubr.f32.mxu0 0.0
        %965 = vmatmul.mubr.f32.gmra.mxu0 %v217
        %v966 = vpop.f32.mrf.mxu0
        %v967 = vadd.f32 0.0, %v966
        %v968 = vpop.f32.mrf.mxu0
        %969 = vmatprep.mubr.f32.mxu0 0.0
        %970 = vmatmul.mubr.f32.gmra.mxu0 %v218
        %v971 = vpop.f32.mrf.mxu0
        %v972 = vadd.f32 0.0, %v971
        %v973 = vpop.f32.mrf.mxu0
        %974 = vmatprep.mubr.f32.mxu0 0.0
        %975 = vmatmul.mubr.f32.gmra.mxu0 %v220
        %v976 = vpop.f32.mrf.mxu0
        %v977 = vadd.f32 0.0, %v976
        %v978 = vpop.f32.mrf.mxu0
        %979 = vmatprep.mubr.f32.mxu0 0.0
        %980 = vmatmul.mubr.f32.gmra.mxu0 %v221
        %v981 = vpop.f32.mrf.mxu0
        %v982 = vadd.f32 0.0, %v981
        %v983 = vpop.f32.mrf.mxu0
        %984 = vmatprep.mubr.f32.mxu0 0.0
        %985 = vmatmul.mubr.f32.gmra.mxu0 %v223
        %v986 = vpop.f32.mrf.mxu0
        %v987 = vadd.f32 0.0, %v986
        %v988 = vpop.f32.mrf.mxu0
        %989 = vmatprep.mubr.f32.mxu0 0.0
        %990 = vmatmul.mubr.f32.gmra.mxu0 %v224
        %v991 = vpop.f32.mrf.mxu0
        %v992 = vadd.f32 0.0, %v991
        %v993 = vpop.f32.mrf.mxu0
        %994 = vmatprep.mubr.f32.mxu0 0.0
        %995 = vmatmul.mubr.f32.gmra.mxu0 %v226
        %v996 = vpop.f32.mrf.mxu0
        %v997 = vadd.f32 0.0, %v996
        %v998 = vpop.f32.mrf.mxu0
        %999 = vmatprep.mubr.f32.mxu0 0.0
        %1000 = vmatmul.mubr.f32.gmra.mxu0 %v227
        %v1001 = vpop.f32.mrf.mxu0
        %v1002 = vadd.f32 0.0, %v1001
        %v1003 = vpop.f32.mrf.mxu0
        %1004 = vmatprep.mubr.f32.mxu0 0.0
        %1005 = vmatmul.mubr.f32.gmra.mxu0 %v229
        %v1006 = vpop.f32.mrf.mxu0
        %v1007 = vadd.f32 0.0, %v1006
        %v1008 = vpop.f32.mrf.mxu0
        %1009 = vmatprep.mubr.f32.mxu0 0.0
        %1010 = vmatmul.mubr.f32.gmra.mxu0 %v230
        %v1011 = vpop.f32.mrf.mxu0
        %v1012 = vadd.f32 0.0, %v1011
        %v1013 = vpop.f32.mrf.mxu0
        %1014 = vmatprep.mubr.f32.mxu0 0.0
        %1015 = vmatmul.mubr.f32.gmra.mxu0 %v232
        %v1016 = vpop.f32.mrf.mxu0
        %v1017 = vadd.f32 0.0, %v1016
        %v1018 = vpop.f32.mrf.mxu0
        %1019 = vmatprep.mubr.f32.mxu0 0.0
        %1020 = vmatmul.mubr.f32.gmra.mxu0 %v233
        %v1021 = vpop.f32.mrf.mxu0
        %v1022 = vadd.f32 0.0, %v1021
        %v1023 = vpop.f32.mrf.mxu0
        %1024 = vmatprep.mubr.f32.mxu0 0.0
        %1025 = vmatmul.mubr.f32.gmra.mxu0 %v235
        %v1026 = vpop.f32.mrf.mxu0
        %v1027 = vadd.f32 0.0, %v1026
        %v1028 = vpop.f32.mrf.mxu0
        %1029 = vmatprep.mubr.f32.mxu0 0.0
        %1030 = vmatmul.mubr.f32.gmra.mxu0 %v236
        %v1031 = vpop.f32.mrf.mxu0
        %v1032 = vadd.f32 0.0, %v1031
        %v1033 = vpop.f32.mrf.mxu0
        %1034 = vmatprep.mubr.f32.mxu0 0.0
        %1035 = vmatmul.mubr.f32.gmra.mxu0 %v238
        %v1036 = vpop.f32.mrf.mxu0
        %v1037 = vadd.f32 0.0, %v1036
        %v1038 = vpop.f32.mrf.mxu0
        %1039 = vmatprep.mubr.f32.mxu0 0.0
        %1040 = vmatmul.mubr.f32.gmra.mxu0 %v239
        %v1041 = vpop.f32.mrf.mxu0
        %v1042 = vadd.f32 0.0, %v1041
        %v1043 = vpop.f32.mrf.mxu0
        %1044 = vdwg.mxu0
        %v1045 = vadd.f32 %v867, %v967
        %v1046 = vadd.f32 %v868, %v972
        %v1047 = vadd.f32 %v869, %v977
        %v1048 = vadd.f32 %v870, %v982
        %v1049 = vadd.f32 %v871, %v987
        %v1050 = vadd.f32 %v872, %v992
        %v1051 = vadd.f32 %v873, %v997
        %v1052 = vadd.f32 %v874, %v1002
        %v1053 = vadd.f32 %v875, %v1007
        %v1054 = vadd.f32 %v876, %v1012
        %v1055 = vadd.f32 %v877, %v1017
        %v1056 = vadd.f32 %v878, %v1022
        %v1057 = vadd.f32 %v879, %v1027
        %v1058 = vadd.f32 %v880, %v1032
        %v1059 = vadd.f32 %v881, %v1037
        %v1060 = vadd.f32 %v882, %v1042
        %v1064 = vrot.slane %v238, 1
        %v1065 = vrot.slane %v239, 1
        %v1066 = vsel %vm284, %v1064, %v1065
        %v1067 = vrot.slane %v240, 1
        %v1068 = vsel %vm284, %v1065, %v1067
        %s1071 = scalar_lea.vmem %s1, 512
        %v1072 = vld [vmem:[%s1071] sm:$0xff]
        %v1073 = vld [vmem:[%s1071 + $0x8] sm:$0xff]
        %v1074 = vld [vmem:[%s1071 + $0x10] sm:$0xff]
        %v1075 = vld [vmem:[%s1071 + $0x18] sm:$0xff]
        %v1076 = vld [vmem:[%s1071 + $0x20] sm:$0xff]
        %v1077 = vld [vmem:[%s1071 + $0x28] sm:$0xff]
        %v1078 = vld [vmem:[%s1071 + $0x30] sm:$0xff]
        %v1079 = vld [vmem:[%s1071 + $0x38] sm:$0xff]
        %v1080 = vld [vmem:[%s1071 + $0x40] sm:$0xff]
        %v1081 = vld [vmem:[%s1071 + $0x48] sm:$0xff]
        %v1082 = vld [vmem:[%s1071 + $0x50] sm:$0xff]
        %v1083 = vld [vmem:[%s1071 + $0x58] sm:$0xff]
        %v1084 = vld [vmem:[%s1071 + $0x60] sm:$0xff]
        %v1085 = vld [vmem:[%s1071 + $0x68] sm:$0xff]
        %v1086 = vld [vmem:[%s1071 + $0x70] sm:$0xff]
        %v1087 = vld [vmem:[%s1071 + $0x78] sm:$0xff]
        %1088 = vmatprep.subr.mxu0 0.0
        %1089 = vmatpush1.msra.mxu0 %v1087
        %1090 = vmatprep.subr.mxu0 0.0
        %1091 = vmatpush1.msra.mxu0 %v1086
        %1092 = vmatprep.subr.mxu0 0.0
        %1093 = vmatpush1.msra.mxu0 %v1085
        %1094 = vmatprep.subr.mxu0 0.0
        %1095 = vmatpush1.msra.mxu0 %v1084
        %1096 = vmatprep.subr.mxu0 0.0
        %1097 = vmatpush1.msra.mxu0 %v1083
        %1098 = vmatprep.subr.mxu0 0.0
        %1099 = vmatpush1.msra.mxu0 %v1082
        %1100 = vmatprep.subr.mxu0 0.0
        %1101 = vmatpush1.msra.mxu0 %v1081
        %1102 = vmatprep.subr.mxu0 0.0
        %1103 = vmatpush1.msra.mxu0 %v1080
        %1104 = vmatprep.subr.mxu0 0.0
        %1105 = vmatpush1.msra.mxu0 %v1079
        %1106 = vmatprep.subr.mxu0 0.0
        %1107 = vmatpush1.msra.mxu0 %v1078
        %1108 = vmatprep.subr.mxu0 0.0
        %1109 = vmatpush1.msra.mxu0 %v1077
        %1110 = vmatprep.subr.mxu0 0.0
        %1111 = vmatpush1.msra.mxu0 %v1076
        %1112 = vmatprep.subr.mxu0 0.0
        %1113 = vmatpush1.msra.mxu0 %v1075
        %1114 = vmatprep.subr.mxu0 0.0
        %1115 = vmatpush1.msra.mxu0 %v1074
        %1116 = vmatprep.subr.mxu0 0.0
        %1117 = vmatpush1.msra.mxu0 %v1073
        %1118 = vmatprep.subr.mxu0 0.0
        %1119 = vmatpush1.msra.mxu0 %v1072
        %1120 = vmatprep.subr.mxu0 0.0
        %1121 = vmatpush2.msra.mxu0 0.0
        %1122 = vmatprep.subr.mxu0 0.0
        %1123 = vmatpush2.msra.mxu0 0.0
        %1124 = vmatprep.subr.mxu0 0.0
        %1125 = vmatpush2.msra.mxu0 0.0
        %1126 = vmatprep.subr.mxu0 0.0
        %1127 = vmatpush2.msra.mxu0 0.0
        %1128 = vmatprep.subr.mxu0 0.0
        %1129 = vmatpush2.msra.mxu0 0.0
        %1130 = vmatprep.subr.mxu0 0.0
        %1131 = vmatpush2.msra.mxu0 0.0
        %1132 = vmatprep.subr.mxu0 0.0
        %1133 = vmatpush2.msra.mxu0 0.0
        %1134 = vmatprep.subr.mxu0 0.0
        %1135 = vmatpush2.msra.mxu0 0.0
        %1136 = vmatprep.subr.mxu0 0.0
        %1137 = vmatpush2.msra.mxu0 0.0
        %1138 = vmatprep.subr.mxu0 0.0
        %1139 = vmatpush2.msra.mxu0 0.0
        %1140 = vmatprep.subr.mxu0 0.0
        %1141 = vmatpush2.msra.mxu0 0.0
        %1142 = vmatprep.subr.mxu0 0.0
        %1143 = vmatpush2.msra.mxu0 0.0
        %1144 = vmatprep.subr.mxu0 0.0
        %1145 = vmatpush2.msra.mxu0 0.0
        %1146 = vmatprep.subr.mxu0 0.0
        %1147 = vmatpush2.msra.mxu0 0.0
        %1148 = vmatprep.subr.mxu0 0.0
        %1149 = vmatpush2.msra.mxu0 0.0
        %1150 = vmatprep.subr.mxu0 0.0
        %1151 = vmatpush2.msra.mxu0 0.0
        %1152 = vmatprep.mubr.f32.mxu0 0.0
        %1153 = vmatmul.mubr.f32.gmra.mxu0 %v292
        %v1154 = vpop.f32.mrf.mxu0
        %v1155 = vadd.f32 0.0, %v1154
        %v1156 = vpop.f32.mrf.mxu0
        %1157 = vmatprep.mubr.f32.mxu0 0.0
        %1158 = vmatmul.mubr.f32.gmra.mxu0 %v294
        %v1159 = vpop.f32.mrf.mxu0
        %v1160 = vadd.f32 0.0, %v1159
        %v1161 = vpop.f32.mrf.mxu0
        %1162 = vmatprep.mubr.f32.mxu0 0.0
        %1163 = vmatmul.mubr.f32.gmra.mxu0 %v297
        %v1164 = vpop.f32.mrf.mxu0
        %v1165 = vadd.f32 0.0, %v1164
        %v1166 = vpop.f32.mrf.mxu0
        %1167 = vmatprep.mubr.f32.mxu0 0.0
        %1168 = vmatmul.mubr.f32.gmra.mxu0 %v299
        %v1169 = vpop.f32.mrf.mxu0
        %v1170 = vadd.f32 0.0, %v1169
        %v1171 = vpop.f32.mrf.mxu0
        %1172 = vmatprep.mubr.f32.mxu0 0.0
        %1173 = vmatmul.mubr.f32.gmra.mxu0 %v302
        %v1174 = vpop.f32.mrf.mxu0
        %v1175 = vadd.f32 0.0, %v1174
        %v1176 = vpop.f32.mrf.mxu0
        %1177 = vmatprep.mubr.f32.mxu0 0.0
        %1178 = vmatmul.mubr.f32.gmra.mxu0 %v304
        %v1179 = vpop.f32.mrf.mxu0
        %v1180 = vadd.f32 0.0, %v1179
        %v1181 = vpop.f32.mrf.mxu0
        %1182 = vmatprep.mubr.f32.mxu0 0.0
        %1183 = vmatmul.mubr.f32.gmra.mxu0 %v307
        %v1184 = vpop.f32.mrf.mxu0
        %v1185 = vadd.f32 0.0, %v1184
        %v1186 = vpop.f32.mrf.mxu0
        %1187 = vmatprep.mubr.f32.mxu0 0.0
        %1188 = vmatmul.mubr.f32.gmra.mxu0 %v309
        %v1189 = vpop.f32.mrf.mxu0
        %v1190 = vadd.f32 0.0, %v1189
        %v1191 = vpop.f32.mrf.mxu0
        %1192 = vmatprep.mubr.f32.mxu0 0.0
        %1193 = vmatmul.mubr.f32.gmra.mxu0 %v312
        %v1194 = vpop.f32.mrf.mxu0
        %v1195 = vadd.f32 0.0, %v1194
        %v1196 = vpop.f32.mrf.mxu0
        %1197 = vmatprep.mubr.f32.mxu0 0.0
        %1198 = vmatmul.mubr.f32.gmra.mxu0 %v314
        %v1199 = vpop.f32.mrf.mxu0
        %v1200 = vadd.f32 0.0, %v1199
        %v1201 = vpop.f32.mrf.mxu0
        %1202 = vmatprep.mubr.f32.mxu0 0.0
        %1203 = vmatmul.mubr.f32.gmra.mxu0 %v317
        %v1204 = vpop.f32.mrf.mxu0
        %v1205 = vadd.f32 0.0, %v1204
        %v1206 = vpop.f32.mrf.mxu0
        %1207 = vmatprep.mubr.f32.mxu0 0.0
        %1208 = vmatmul.mubr.f32.gmra.mxu0 %v319
        %v1209 = vpop.f32.mrf.mxu0
        %v1210 = vadd.f32 0.0, %v1209
        %v1211 = vpop.f32.mrf.mxu0
        %1212 = vmatprep.mubr.f32.mxu0 0.0
        %1213 = vmatmul.mubr.f32.gmra.mxu0 %v322
        %v1214 = vpop.f32.mrf.mxu0
        %v1215 = vadd.f32 0.0, %v1214
        %v1216 = vpop.f32.mrf.mxu0
        %1217 = vmatprep.mubr.f32.mxu0 0.0
        %1218 = vmatmul.mubr.f32.gmra.mxu0 %v324
        %v1219 = vpop.f32.mrf.mxu0
        %v1220 = vadd.f32 0.0, %v1219
        %v1221 = vpop.f32.mrf.mxu0
        %1222 = vmatprep.mubr.f32.mxu0 0.0
        %1223 = vmatmul.mubr.f32.gmra.mxu0 %v1066
        %v1224 = vpop.f32.mrf.mxu0
        %v1225 = vadd.f32 0.0, %v1224
        %v1226 = vpop.f32.mrf.mxu0
        %1227 = vmatprep.mubr.f32.mxu0 0.0
        %1228 = vmatmul.mubr.f32.gmra.mxu0 %v1068
        %v1229 = vpop.f32.mrf.mxu0
        %v1230 = vadd.f32 0.0, %v1229
        %v1231 = vpop.f32.mrf.mxu0
        %1232 = vdwg.mxu0
        %v1233 = vadd.f32 %v1045, %v1155
        %v1234 = vadd.f32 %v1046, %v1160
        %v1235 = vadd.f32 %v1047, %v1165
        %v1236 = vadd.f32 %v1048, %v1170
        %v1237 = vadd.f32 %v1049, %v1175
        %v1238 = vadd.f32 %v1050, %v1180
        %v1239 = vadd.f32 %v1051, %v1185
        %v1240 = vadd.f32 %v1052, %v1190
        %v1241 = vadd.f32 %v1053, %v1195
        %v1242 = vadd.f32 %v1054, %v1200
        %v1243 = vadd.f32 %v1055, %v1205
        %v1244 = vadd.f32 %v1056, %v1210
        %v1245 = vadd.f32 %v1057, %v1215
        %v1246 = vadd.f32 %v1058, %v1220
        %v1247 = vadd.f32 %v1059, %v1225
        %v1248 = vadd.f32 %v1060, %v1230
        %v1249 = vrot.slane %v238, 2
        %v1250 = vrot.slane %v239, 2
        %v1251 = vsel %vm648, %v1249, %v1250
        %v1252 = vrot.slane %v240, 2
        %v1253 = vsel %vm648, %v1250, %v1252
        %s1256 = scalar_lea.vmem %s1, 640
        %v1257 = vld [vmem:[%s1256] sm:$0xff]
        %v1258 = vld [vmem:[%s1256 + $0x8] sm:$0xff]
        %v1259 = vld [vmem:[%s1256 + $0x10] sm:$0xff]
        %v1260 = vld [vmem:[%s1256 + $0x18] sm:$0xff]
        %v1261 = vld [vmem:[%s1256 + $0x20] sm:$0xff]
        %v1262 = vld [vmem:[%s1256 + $0x28] sm:$0xff]
        %v1263 = vld [vmem:[%s1256 + $0x30] sm:$0xff]
        %v1264 = vld [vmem:[%s1256 + $0x38] sm:$0xff]
        %v1265 = vld [vmem:[%s1256 + $0x40] sm:$0xff]
        %v1266 = vld [vmem:[%s1256 + $0x48] sm:$0xff]
        %v1267 = vld [vmem:[%s1256 + $0x50] sm:$0xff]
        %v1268 = vld [vmem:[%s1256 + $0x58] sm:$0xff]
        %v1269 = vld [vmem:[%s1256 + $0x60] sm:$0xff]
        %v1270 = vld [vmem:[%s1256 + $0x68] sm:$0xff]
        %v1271 = vld [vmem:[%s1256 + $0x70] sm:$0xff]
        %v1272 = vld [vmem:[%s1256 + $0x78] sm:$0xff]
        %1273 = vmatprep.subr.mxu0 0.0
        %1274 = vmatpush1.msra.mxu0 %v1272
        %1275 = vmatprep.subr.mxu0 0.0
        %1276 = vmatpush1.msra.mxu0 %v1271
        %1277 = vmatprep.subr.mxu0 0.0
        %1278 = vmatpush1.msra.mxu0 %v1270
        %1279 = vmatprep.subr.mxu0 0.0
        %1280 = vmatpush1.msra.mxu0 %v1269
        %1281 = vmatprep.subr.mxu0 0.0
        %1282 = vmatpush1.msra.mxu0 %v1268
        %1283 = vmatprep.subr.mxu0 0.0
        %1284 = vmatpush1.msra.mxu0 %v1267
        %1285 = vmatprep.subr.mxu0 0.0
        %1286 = vmatpush1.msra.mxu0 %v1266
        %1287 = vmatprep.subr.mxu0 0.0
        %1288 = vmatpush1.msra.mxu0 %v1265
        %1289 = vmatprep.subr.mxu0 0.0
        %1290 = vmatpush1.msra.mxu0 %v1264
        %1291 = vmatprep.subr.mxu0 0.0
        %1292 = vmatpush1.msra.mxu0 %v1263
        %1293 = vmatprep.subr.mxu0 0.0
        %1294 = vmatpush1.msra.mxu0 %v1262
        %1295 = vmatprep.subr.mxu0 0.0
        %1296 = vmatpush1.msra.mxu0 %v1261
        %1297 = vmatprep.subr.mxu0 0.0
        %1298 = vmatpush1.msra.mxu0 %v1260
        %1299 = vmatprep.subr.mxu0 0.0
        %1300 = vmatpush1.msra.mxu0 %v1259
        %1301 = vmatprep.subr.mxu0 0.0
        %1302 = vmatpush1.msra.mxu0 %v1258
        %1303 = vmatprep.subr.mxu0 0.0
        %1304 = vmatpush1.msra.mxu0 %v1257
        %1305 = vmatprep.subr.mxu0 0.0
        %1306 = vmatpush2.msra.mxu0 0.0
        %1307 = vmatprep.subr.mxu0 0.0
        %1308 = vmatpush2.msra.mxu0 0.0
        %1309 = vmatprep.subr.mxu0 0.0
        %1310 = vmatpush2.msra.mxu0 0.0
        %1311 = vmatprep.subr.mxu0 0.0
        %1312 = vmatpush2.msra.mxu0 0.0
        %1313 = vmatprep.subr.mxu0 0.0
        %1314 = vmatpush2.msra.mxu0 0.0
        %1315 = vmatprep.subr.mxu0 0.0
        %1316 = vmatpush2.msra.mxu0 0.0
        %1317 = vmatprep.subr.mxu0 0.0
        %1318 = vmatpush2.msra.mxu0 0.0
        %1319 = vmatprep.subr.mxu0 0.0
        %1320 = vmatpush2.msra.mxu0 0.0
        %1321 = vmatprep.subr.mxu0 0.0
        %1322 = vmatpush2.msra.mxu0 0.0
        %1323 = vmatprep.subr.mxu0 0.0
        %1324 = vmatpush2.msra.mxu0 0.0
        %1325 = vmatprep.subr.mxu0 0.0
        %1326 = vmatpush2.msra.mxu0 0.0
        %1327 = vmatprep.subr.mxu0 0.0
        %1328 = vmatpush2.msra.mxu0 0.0
        %1329 = vmatprep.subr.mxu0 0.0
        %1330 = vmatpush2.msra.mxu0 0.0
        %1331 = vmatprep.subr.mxu0 0.0
        %1332 = vmatpush2.msra.mxu0 0.0
        %1333 = vmatprep.subr.mxu0 0.0
        %1334 = vmatpush2.msra.mxu0 0.0
        %1335 = vmatprep.subr.mxu0 0.0
        %1336 = vmatpush2.msra.mxu0 0.0
        %1337 = vmatprep.mubr.f32.mxu0 0.0
        %1338 = vmatmul.mubr.f32.gmra.mxu0 %v656
        %v1339 = vpop.f32.mrf.mxu0
        %v1340 = vadd.f32 0.0, %v1339
        %v1341 = vpop.f32.mrf.mxu0
        %1342 = vmatprep.mubr.f32.mxu0 0.0
        %1343 = vmatmul.mubr.f32.gmra.mxu0 %v658
        %v1344 = vpop.f32.mrf.mxu0
        %v1345 = vadd.f32 0.0, %v1344
        %v1346 = vpop.f32.mrf.mxu0
        %1347 = vmatprep.mubr.f32.mxu0 0.0
        %1348 = vmatmul.mubr.f32.gmra.mxu0 %v661
        %v1349 = vpop.f32.mrf.mxu0
        %v1350 = vadd.f32 0.0, %v1349
        %v1351 = vpop.f32.mrf.mxu0
        %1352 = vmatprep.mubr.f32.mxu0 0.0
        %1353 = vmatmul.mubr.f32.gmra.mxu0 %v663
        %v1354 = vpop.f32.mrf.mxu0
        %v1355 = vadd.f32 0.0, %v1354
        %v1356 = vpop.f32.mrf.mxu0
        %1357 = vmatprep.mubr.f32.mxu0 0.0
        %1358 = vmatmul.mubr.f32.gmra.mxu0 %v666
        %v1359 = vpop.f32.mrf.mxu0
        %v1360 = vadd.f32 0.0, %v1359
        %v1361 = vpop.f32.mrf.mxu0
        %1362 = vmatprep.mubr.f32.mxu0 0.0
        %1363 = vmatmul.mubr.f32.gmra.mxu0 %v668
        %v1364 = vpop.f32.mrf.mxu0
        %v1365 = vadd.f32 0.0, %v1364
        %v1366 = vpop.f32.mrf.mxu0
        %1367 = vmatprep.mubr.f32.mxu0 0.0
        %1368 = vmatmul.mubr.f32.gmra.mxu0 %v671
        %v1369 = vpop.f32.mrf.mxu0
        %v1370 = vadd.f32 0.0, %v1369
        %v1371 = vpop.f32.mrf.mxu0
        %1372 = vmatprep.mubr.f32.mxu0 0.0
        %1373 = vmatmul.mubr.f32.gmra.mxu0 %v673
        %v1374 = vpop.f32.mrf.mxu0
        %v1375 = vadd.f32 0.0, %v1374
        %v1376 = vpop.f32.mrf.mxu0
        %1377 = vmatprep.mubr.f32.mxu0 0.0
        %1378 = vmatmul.mubr.f32.gmra.mxu0 %v676
        %v1379 = vpop.f32.mrf.mxu0
        %v1380 = vadd.f32 0.0, %v1379
        %v1381 = vpop.f32.mrf.mxu0
        %1382 = vmatprep.mubr.f32.mxu0 0.0
        %1383 = vmatmul.mubr.f32.gmra.mxu0 %v678
        %v1384 = vpop.f32.mrf.mxu0
        %v1385 = vadd.f32 0.0, %v1384
        %v1386 = vpop.f32.mrf.mxu0
        %1387 = vmatprep.mubr.f32.mxu0 0.0
        %1388 = vmatmul.mubr.f32.gmra.mxu0 %v681
        %v1389 = vpop.f32.mrf.mxu0
        %v1390 = vadd.f32 0.0, %v1389
        %v1391 = vpop.f32.mrf.mxu0
        %1392 = vmatprep.mubr.f32.mxu0 0.0
        %1393 = vmatmul.mubr.f32.gmra.mxu0 %v683
        %v1394 = vpop.f32.mrf.mxu0
        %v1395 = vadd.f32 0.0, %v1394
        %v1396 = vpop.f32.mrf.mxu0
        %1397 = vmatprep.mubr.f32.mxu0 0.0
        %1398 = vmatmul.mubr.f32.gmra.mxu0 %v686
        %v1399 = vpop.f32.mrf.mxu0
        %v1400 = vadd.f32 0.0, %v1399
        %v1401 = vpop.f32.mrf.mxu0
        %1402 = vmatprep.mubr.f32.mxu0 0.0
        %1403 = vmatmul.mubr.f32.gmra.mxu0 %v688
        %v1404 = vpop.f32.mrf.mxu0
        %v1405 = vadd.f32 0.0, %v1404
        %v1406 = vpop.f32.mrf.mxu0
        %1407 = vmatprep.mubr.f32.mxu0 0.0
        %1408 = vmatmul.mubr.f32.gmra.mxu0 %v1251
        %v1409 = vpop.f32.mrf.mxu0
        %v1410 = vadd.f32 0.0, %v1409
        %v1411 = vpop.f32.mrf.mxu0
        %1412 = vmatprep.mubr.f32.mxu0 0.0
        %1413 = vmatmul.mubr.f32.gmra.mxu0 %v1253
        %v1414 = vpop.f32.mrf.mxu0
        %v1415 = vadd.f32 0.0, %v1414
        %v1416 = vpop.f32.mrf.mxu0
        %1417 = vdwg.mxu0
        %v1418 = vadd.f32 %v1233, %v1340
        %v1419 = vadd.f32 %v1234, %v1345
        %v1420 = vadd.f32 %v1235, %v1350
        %v1421 = vadd.f32 %v1236, %v1355
        %v1422 = vadd.f32 %v1237, %v1360
        %v1423 = vadd.f32 %v1238, %v1365
        %v1424 = vadd.f32 %v1239, %v1370
        %v1425 = vadd.f32 %v1240, %v1375
        %v1426 = vadd.f32 %v1241, %v1380
        %v1427 = vadd.f32 %v1242, %v1385
        %v1428 = vadd.f32 %v1243, %v1390
        %v1429 = vadd.f32 %v1244, %v1395
        %v1430 = vadd.f32 %v1245, %v1400
        %v1431 = vadd.f32 %v1246, %v1405
        %v1432 = vadd.f32 %v1247, %v1410
        %v1433 = vadd.f32 %v1248, %v1415
        %s1434 = scalar_lea.vmem %s1, 768
        %v1435 = vld [vmem:[%s1434] sm:$0xff]
        %v1436 = vld [vmem:[%s1434 + $0x8] sm:$0xff]
        %v1437 = vld [vmem:[%s1434 + $0x10] sm:$0xff]
        %v1438 = vld [vmem:[%s1434 + $0x18] sm:$0xff]
        %v1439 = vld [vmem:[%s1434 + $0x20] sm:$0xff]
        %v1440 = vld [vmem:[%s1434 + $0x28] sm:$0xff]
        %v1441 = vld [vmem:[%s1434 + $0x30] sm:$0xff]
        %v1442 = vld [vmem:[%s1434 + $0x38] sm:$0xff]
        %v1443 = vld [vmem:[%s1434 + $0x40] sm:$0xff]
        %v1444 = vld [vmem:[%s1434 + $0x48] sm:$0xff]
        %v1445 = vld [vmem:[%s1434 + $0x50] sm:$0xff]
        %v1446 = vld [vmem:[%s1434 + $0x58] sm:$0xff]
        %v1447 = vld [vmem:[%s1434 + $0x60] sm:$0xff]
        %v1448 = vld [vmem:[%s1434 + $0x68] sm:$0xff]
        %v1449 = vld [vmem:[%s1434 + $0x70] sm:$0xff]
        %v1450 = vld [vmem:[%s1434 + $0x78] sm:$0xff]
        %1451 = vmatprep.subr.mxu0 0.0
        %1452 = vmatpush1.msra.mxu0 %v1450
        %1453 = vmatprep.subr.mxu0 0.0
        %1454 = vmatpush1.msra.mxu0 %v1449
        %1455 = vmatprep.subr.mxu0 0.0
        %1456 = vmatpush1.msra.mxu0 %v1448
        %1457 = vmatprep.subr.mxu0 0.0
        %1458 = vmatpush1.msra.mxu0 %v1447
        %1459 = vmatprep.subr.mxu0 0.0
        %1460 = vmatpush1.msra.mxu0 %v1446
        %1461 = vmatprep.subr.mxu0 0.0
        %1462 = vmatpush1.msra.mxu0 %v1445
        %1463 = vmatprep.subr.mxu0 0.0
        %1464 = vmatpush1.msra.mxu0 %v1444
        %1465 = vmatprep.subr.mxu0 0.0
        %1466 = vmatpush1.msra.mxu0 %v1443
        %1467 = vmatprep.subr.mxu0 0.0
        %1468 = vmatpush1.msra.mxu0 %v1442
        %1469 = vmatprep.subr.mxu0 0.0
        %1470 = vmatpush1.msra.mxu0 %v1441
        %1471 = vmatprep.subr.mxu0 0.0
        %1472 = vmatpush1.msra.mxu0 %v1440
        %1473 = vmatprep.subr.mxu0 0.0
        %1474 = vmatpush1.msra.mxu0 %v1439
        %1475 = vmatprep.subr.mxu0 0.0
        %1476 = vmatpush1.msra.mxu0 %v1438
        %1477 = vmatprep.subr.mxu0 0.0
        %1478 = vmatpush1.msra.mxu0 %v1437
        %1479 = vmatprep.subr.mxu0 0.0
        %1480 = vmatpush1.msra.mxu0 %v1436
        %1481 = vmatprep.subr.mxu0 0.0
        %1482 = vmatpush1.msra.mxu0 %v1435
        %1483 = vmatprep.subr.mxu0 0.0
        %1484 = vmatpush2.msra.mxu0 0.0
        %1485 = vmatprep.subr.mxu0 0.0
        %1486 = vmatpush2.msra.mxu0 0.0
        %1487 = vmatprep.subr.mxu0 0.0
        %1488 = vmatpush2.msra.mxu0 0.0
        %1489 = vmatprep.subr.mxu0 0.0
        %1490 = vmatpush2.msra.mxu0 0.0
        %1491 = vmatprep.subr.mxu0 0.0
        %1492 = vmatpush2.msra.mxu0 0.0
        %1493 = vmatprep.subr.mxu0 0.0
        %1494 = vmatpush2.msra.mxu0 0.0
        %1495 = vmatprep.subr.mxu0 0.0
        %1496 = vmatpush2.msra.mxu0 0.0
        %1497 = vmatprep.subr.mxu0 0.0
        %1498 = vmatpush2.msra.mxu0 0.0
        %1499 = vmatprep.subr.mxu0 0.0
        %1500 = vmatpush2.msra.mxu0 0.0
        %1501 = vmatprep.subr.mxu0 0.0
        %1502 = vmatpush2.msra.mxu0 0.0
        %1503 = vmatprep.subr.mxu0 0.0
        %1504 = vmatpush2.msra.mxu0 0.0
        %1505 = vmatprep.subr.mxu0 0.0
        %1506 = vmatpush2.msra.mxu0 0.0
        %1507 = vmatprep.subr.mxu0 0.0
        %1508 = vmatpush2.msra.mxu0 0.0
        %1509 = vmatprep.subr.mxu0 0.0
        %1510 = vmatpush2.msra.mxu0 0.0
        %1511 = vmatprep.subr.mxu0 0.0
        %1512 = vmatpush2.msra.mxu0 0.0
        %1513 = vmatprep.subr.mxu0 0.0
        %1514 = vmatpush2.msra.mxu0 0.0
        %1515 = vmatprep.mubr.f32.mxu0 0.0
        %1516 = vmatmul.mubr.f32.gmra.mxu0 %v220
        %v1517 = vpop.f32.mrf.mxu0
        %v1518 = vadd.f32 0.0, %v1517
        %v1519 = vpop.f32.mrf.mxu0
        %1520 = vmatprep.mubr.f32.mxu0 0.0
        %1521 = vmatmul.mubr.f32.gmra.mxu0 %v221
        %v1522 = vpop.f32.mrf.mxu0
        %v1523 = vadd.f32 0.0, %v1522
        %v1524 = vpop.f32.mrf.mxu0
        %1525 = vmatprep.mubr.f32.mxu0 0.0
        %1526 = vmatmul.mubr.f32.gmra.mxu0 %v223
        %v1527 = vpop.f32.mrf.mxu0
        %v1528 = vadd.f32 0.0, %v1527
        %v1529 = vpop.f32.mrf.mxu0
        %1530 = vmatprep.mubr.f32.mxu0 0.0
        %1531 = vmatmul.mubr.f32.gmra.mxu0 %v224
        %v1532 = vpop.f32.mrf.mxu0
        %v1533 = vadd.f32 0.0, %v1532
        %v1534 = vpop.f32.mrf.mxu0
        %1535 = vmatprep.mubr.f32.mxu0 0.0
        %1536 = vmatmul.mubr.f32.gmra.mxu0 %v226
        %v1537 = vpop.f32.mrf.mxu0
        %v1538 = vadd.f32 0.0, %v1537
        %v1539 = vpop.f32.mrf.mxu0
        %1540 = vmatprep.mubr.f32.mxu0 0.0
        %1541 = vmatmul.mubr.f32.gmra.mxu0 %v227
        %v1542 = vpop.f32.mrf.mxu0
        %v1543 = vadd.f32 0.0, %v1542
        %v1544 = vpop.f32.mrf.mxu0
        %1545 = vmatprep.mubr.f32.mxu0 0.0
        %1546 = vmatmul.mubr.f32.gmra.mxu0 %v229
        %v1547 = vpop.f32.mrf.mxu0
        %v1548 = vadd.f32 0.0, %v1547
        %v1549 = vpop.f32.mrf.mxu0
        %1550 = vmatprep.mubr.f32.mxu0 0.0
        %1551 = vmatmul.mubr.f32.gmra.mxu0 %v230
        %v1552 = vpop.f32.mrf.mxu0
        %v1553 = vadd.f32 0.0, %v1552
        %v1554 = vpop.f32.mrf.mxu0
        %1555 = vmatprep.mubr.f32.mxu0 0.0
        %1556 = vmatmul.mubr.f32.gmra.mxu0 %v232
        %v1557 = vpop.f32.mrf.mxu0
        %v1558 = vadd.f32 0.0, %v1557
        %v1559 = vpop.f32.mrf.mxu0
        %1560 = vmatprep.mubr.f32.mxu0 0.0
        %1561 = vmatmul.mubr.f32.gmra.mxu0 %v233
        %v1562 = vpop.f32.mrf.mxu0
        %v1563 = vadd.f32 0.0, %v1562
        %v1564 = vpop.f32.mrf.mxu0
        %1565 = vmatprep.mubr.f32.mxu0 0.0
        %1566 = vmatmul.mubr.f32.gmra.mxu0 %v235
        %v1567 = vpop.f32.mrf.mxu0
        %v1568 = vadd.f32 0.0, %v1567
        %v1569 = vpop.f32.mrf.mxu0
        %1570 = vmatprep.mubr.f32.mxu0 0.0
        %1571 = vmatmul.mubr.f32.gmra.mxu0 %v236
        %v1572 = vpop.f32.mrf.mxu0
        %v1573 = vadd.f32 0.0, %v1572
        %v1574 = vpop.f32.mrf.mxu0
        %1575 = vmatprep.mubr.f32.mxu0 0.0
        %1576 = vmatmul.mubr.f32.gmra.mxu0 %v238
        %v1577 = vpop.f32.mrf.mxu0
        %v1578 = vadd.f32 0.0, %v1577
        %v1579 = vpop.f32.mrf.mxu0
        %1580 = vmatprep.mubr.f32.mxu0 0.0
        %1581 = vmatmul.mubr.f32.gmra.mxu0 %v239
        %v1582 = vpop.f32.mrf.mxu0
        %v1583 = vadd.f32 0.0, %v1582
        %v1584 = vpop.f32.mrf.mxu0
        %1585 = vmatprep.mubr.f32.mxu0 0.0
        %1586 = vmatmul.mubr.f32.gmra.mxu0 %v241
        %v1587 = vpop.f32.mrf.mxu0
        %v1588 = vadd.f32 0.0, %v1587
        %v1589 = vpop.f32.mrf.mxu0
        %1590 = vmatprep.mubr.f32.mxu0 0.0
        %1591 = vmatmul.mubr.f32.gmra.mxu0 %v242
        %v1592 = vpop.f32.mrf.mxu0
        %v1593 = vadd.f32 0.0, %v1592
        %v1594 = vpop.f32.mrf.mxu0
        %1595 = vdwg.mxu0
        %v1596 = vadd.f32 %v1418, %v1518
        %v1597 = vadd.f32 %v1419, %v1523
        %v1598 = vadd.f32 %v1420, %v1528
        %v1599 = vadd.f32 %v1421, %v1533
        %v1600 = vadd.f32 %v1422, %v1538
        %v1601 = vadd.f32 %v1423, %v1543
        %v1602 = vadd.f32 %v1424, %v1548
        %v1603 = vadd.f32 %v1425, %v1553
        %v1604 = vadd.f32 %v1426, %v1558
        %v1605 = vadd.f32 %v1427, %v1563
        %v1606 = vadd.f32 %v1428, %v1568
        %v1607 = vadd.f32 %v1429, %v1573
        %v1608 = vadd.f32 %v1430, %v1578
        %v1609 = vadd.f32 %v1431, %v1583
        %v1610 = vadd.f32 %v1432, %v1588
        %v1611 = vadd.f32 %v1433, %v1593
        %v1615 = vrot.slane %v241, 1
        %v1616 = vrot.slane %v242, 1
        %v1617 = vsel %vm284, %v1615, %v1616
        %v1618 = vrot.slane %v243, 1
        %v1619 = vsel %vm284, %v1616, %v1618
        %s1622 = scalar_lea.vmem %s1, 896
        %v1623 = vld [vmem:[%s1622] sm:$0xff]
        %v1624 = vld [vmem:[%s1622 + $0x8] sm:$0xff]
        %v1625 = vld [vmem:[%s1622 + $0x10] sm:$0xff]
        %v1626 = vld [vmem:[%s1622 + $0x18] sm:$0xff]
        %v1627 = vld [vmem:[%s1622 + $0x20] sm:$0xff]
        %v1628 = vld [vmem:[%s1622 + $0x28] sm:$0xff]
        %v1629 = vld [vmem:[%s1622 + $0x30] sm:$0xff]
        %v1630 = vld [vmem:[%s1622 + $0x38] sm:$0xff]
        %v1631 = vld [vmem:[%s1622 + $0x40] sm:$0xff]
        %v1632 = vld [vmem:[%s1622 + $0x48] sm:$0xff]
        %v1633 = vld [vmem:[%s1622 + $0x50] sm:$0xff]
        %v1634 = vld [vmem:[%s1622 + $0x58] sm:$0xff]
        %v1635 = vld [vmem:[%s1622 + $0x60] sm:$0xff]
        %v1636 = vld [vmem:[%s1622 + $0x68] sm:$0xff]
        %v1637 = vld [vmem:[%s1622 + $0x70] sm:$0xff]
        %v1638 = vld [vmem:[%s1622 + $0x78] sm:$0xff]
        %1639 = vmatprep.subr.mxu0 0.0
        %1640 = vmatpush1.msra.mxu0 %v1638
        %1641 = vmatprep.subr.mxu0 0.0
        %1642 = vmatpush1.msra.mxu0 %v1637
        %1643 = vmatprep.subr.mxu0 0.0
        %1644 = vmatpush1.msra.mxu0 %v1636
        %1645 = vmatprep.subr.mxu0 0.0
        %1646 = vmatpush1.msra.mxu0 %v1635
        %1647 = vmatprep.subr.mxu0 0.0
        %1648 = vmatpush1.msra.mxu0 %v1634
        %1649 = vmatprep.subr.mxu0 0.0
        %1650 = vmatpush1.msra.mxu0 %v1633
        %1651 = vmatprep.subr.mxu0 0.0
        %1652 = vmatpush1.msra.mxu0 %v1632
        %1653 = vmatprep.subr.mxu0 0.0
        %1654 = vmatpush1.msra.mxu0 %v1631
        %1655 = vmatprep.subr.mxu0 0.0
        %1656 = vmatpush1.msra.mxu0 %v1630
        %1657 = vmatprep.subr.mxu0 0.0
        %1658 = vmatpush1.msra.mxu0 %v1629
        %1659 = vmatprep.subr.mxu0 0.0
        %1660 = vmatpush1.msra.mxu0 %v1628
        %1661 = vmatprep.subr.mxu0 0.0
        %1662 = vmatpush1.msra.mxu0 %v1627
        %1663 = vmatprep.subr.mxu0 0.0
        %1664 = vmatpush1.msra.mxu0 %v1626
        %1665 = vmatprep.subr.mxu0 0.0
        %1666 = vmatpush1.msra.mxu0 %v1625
        %1667 = vmatprep.subr.mxu0 0.0
        %1668 = vmatpush1.msra.mxu0 %v1624
        %1669 = vmatprep.subr.mxu0 0.0
        %1670 = vmatpush1.msra.mxu0 %v1623
        %1671 = vmatprep.subr.mxu0 0.0
        %1672 = vmatpush2.msra.mxu0 0.0
        %1673 = vmatprep.subr.mxu0 0.0
        %1674 = vmatpush2.msra.mxu0 0.0
        %1675 = vmatprep.subr.mxu0 0.0
        %1676 = vmatpush2.msra.mxu0 0.0
        %1677 = vmatprep.subr.mxu0 0.0
        %1678 = vmatpush2.msra.mxu0 0.0
        %1679 = vmatprep.subr.mxu0 0.0
        %1680 = vmatpush2.msra.mxu0 0.0
        %1681 = vmatprep.subr.mxu0 0.0
        %1682 = vmatpush2.msra.mxu0 0.0
        %1683 = vmatprep.subr.mxu0 0.0
        %1684 = vmatpush2.msra.mxu0 0.0
        %1685 = vmatprep.subr.mxu0 0.0
        %1686 = vmatpush2.msra.mxu0 0.0
        %1687 = vmatprep.subr.mxu0 0.0
        %1688 = vmatpush2.msra.mxu0 0.0
        %1689 = vmatprep.subr.mxu0 0.0
        %1690 = vmatpush2.msra.mxu0 0.0
        %1691 = vmatprep.subr.mxu0 0.0
        %1692 = vmatpush2.msra.mxu0 0.0
        %1693 = vmatprep.subr.mxu0 0.0
        %1694 = vmatpush2.msra.mxu0 0.0
        %1695 = vmatprep.subr.mxu0 0.0
        %1696 = vmatpush2.msra.mxu0 0.0
        %1697 = vmatprep.subr.mxu0 0.0
        %1698 = vmatpush2.msra.mxu0 0.0
        %1699 = vmatprep.subr.mxu0 0.0
        %1700 = vmatpush2.msra.mxu0 0.0
        %1701 = vmatprep.subr.mxu0 0.0
        %1702 = vmatpush2.msra.mxu0 0.0
        %1703 = vmatprep.mubr.f32.mxu0 0.0
        %1704 = vmatmul.mubr.f32.gmra.mxu0 %v297
        %v1705 = vpop.f32.mrf.mxu0
        %v1706 = vadd.f32 0.0, %v1705
        %v1707 = vpop.f32.mrf.mxu0
        %1708 = vmatprep.mubr.f32.mxu0 0.0
        %1709 = vmatmul.mubr.f32.gmra.mxu0 %v299
        %v1710 = vpop.f32.mrf.mxu0
        %v1711 = vadd.f32 0.0, %v1710
        %v1712 = vpop.f32.mrf.mxu0
        %1713 = vmatprep.mubr.f32.mxu0 0.0
        %1714 = vmatmul.mubr.f32.gmra.mxu0 %v302
        %v1715 = vpop.f32.mrf.mxu0
        %v1716 = vadd.f32 0.0, %v1715
        %v1717 = vpop.f32.mrf.mxu0
        %1718 = vmatprep.mubr.f32.mxu0 0.0
        %1719 = vmatmul.mubr.f32.gmra.mxu0 %v304
        %v1720 = vpop.f32.mrf.mxu0
        %v1721 = vadd.f32 0.0, %v1720
        %v1722 = vpop.f32.mrf.mxu0
        %1723 = vmatprep.mubr.f32.mxu0 0.0
        %1724 = vmatmul.mubr.f32.gmra.mxu0 %v307
        %v1725 = vpop.f32.mrf.mxu0
        %v1726 = vadd.f32 0.0, %v1725
        %v1727 = vpop.f32.mrf.mxu0
        %1728 = vmatprep.mubr.f32.mxu0 0.0
        %1729 = vmatmul.mubr.f32.gmra.mxu0 %v309
        %v1730 = vpop.f32.mrf.mxu0
        %v1731 = vadd.f32 0.0, %v1730
        %v1732 = vpop.f32.mrf.mxu0
        %1733 = vmatprep.mubr.f32.mxu0 0.0
        %1734 = vmatmul.mubr.f32.gmra.mxu0 %v312
        %v1735 = vpop.f32.mrf.mxu0
        %v1736 = vadd.f32 0.0, %v1735
        %v1737 = vpop.f32.mrf.mxu0
        %1738 = vmatprep.mubr.f32.mxu0 0.0
        %1739 = vmatmul.mubr.f32.gmra.mxu0 %v314
        %v1740 = vpop.f32.mrf.mxu0
        %v1741 = vadd.f32 0.0, %v1740
        %v1742 = vpop.f32.mrf.mxu0
        %1743 = vmatprep.mubr.f32.mxu0 0.0
        %1744 = vmatmul.mubr.f32.gmra.mxu0 %v317
        %v1745 = vpop.f32.mrf.mxu0
        %v1746 = vadd.f32 0.0, %v1745
        %v1747 = vpop.f32.mrf.mxu0
        %1748 = vmatprep.mubr.f32.mxu0 0.0
        %1749 = vmatmul.mubr.f32.gmra.mxu0 %v319
        %v1750 = vpop.f32.mrf.mxu0
        %v1751 = vadd.f32 0.0, %v1750
        %v1752 = vpop.f32.mrf.mxu0
        %1753 = vmatprep.mubr.f32.mxu0 0.0
        %1754 = vmatmul.mubr.f32.gmra.mxu0 %v322
        %v1755 = vpop.f32.mrf.mxu0
        %v1756 = vadd.f32 0.0, %v1755
        %v1757 = vpop.f32.mrf.mxu0
        %1758 = vmatprep.mubr.f32.mxu0 0.0
        %1759 = vmatmul.mubr.f32.gmra.mxu0 %v324
        %v1760 = vpop.f32.mrf.mxu0
        %v1761 = vadd.f32 0.0, %v1760
        %v1762 = vpop.f32.mrf.mxu0
        %1763 = vmatprep.mubr.f32.mxu0 0.0
        %1764 = vmatmul.mubr.f32.gmra.mxu0 %v1066
        %v1765 = vpop.f32.mrf.mxu0
        %v1766 = vadd.f32 0.0, %v1765
        %v1767 = vpop.f32.mrf.mxu0
        %1768 = vmatprep.mubr.f32.mxu0 0.0
        %1769 = vmatmul.mubr.f32.gmra.mxu0 %v1068
        %v1770 = vpop.f32.mrf.mxu0
        %v1771 = vadd.f32 0.0, %v1770
        %v1772 = vpop.f32.mrf.mxu0
        %1773 = vmatprep.mubr.f32.mxu0 0.0
        %1774 = vmatmul.mubr.f32.gmra.mxu0 %v1617
        %v1775 = vpop.f32.mrf.mxu0
        %v1776 = vadd.f32 0.0, %v1775
        %v1777 = vpop.f32.mrf.mxu0
        %1778 = vmatprep.mubr.f32.mxu0 0.0
        %1779 = vmatmul.mubr.f32.gmra.mxu0 %v1619
        %v1780 = vpop.f32.mrf.mxu0
        %v1781 = vadd.f32 0.0, %v1780
        %v1782 = vpop.f32.mrf.mxu0
        %1783 = vdwg.mxu0
        %v1784 = vadd.f32 %v1596, %v1706
        %v1785 = vadd.f32 %v1597, %v1711
        %v1786 = vadd.f32 %v1598, %v1716
        %v1787 = vadd.f32 %v1599, %v1721
        %v1788 = vadd.f32 %v1600, %v1726
        %v1789 = vadd.f32 %v1601, %v1731
        %v1790 = vadd.f32 %v1602, %v1736
        %v1791 = vadd.f32 %v1603, %v1741
        %v1792 = vadd.f32 %v1604, %v1746
        %v1793 = vadd.f32 %v1605, %v1751
        %v1794 = vadd.f32 %v1606, %v1756
        %v1795 = vadd.f32 %v1607, %v1761
        %v1796 = vadd.f32 %v1608, %v1766
        %v1797 = vadd.f32 %v1609, %v1771
        %v1798 = vadd.f32 %v1610, %v1776
        %v1799 = vadd.f32 %v1611, %v1781
        %v1800 = vrot.slane %v241, 2
        %v1801 = vrot.slane %v242, 2
        %v1802 = vsel %vm648, %v1800, %v1801
        %v1803 = vrot.slane %v243, 2
        %v1804 = vsel %vm648, %v1801, %v1803
        %s1807 = scalar_lea.vmem %s1, 1024
        %v1808 = vld [vmem:[%s1807] sm:$0xff]
        %v1809 = vld [vmem:[%s1807 + $0x8] sm:$0xff]
        %v1810 = vld [vmem:[%s1807 + $0x10] sm:$0xff]
        %v1811 = vld [vmem:[%s1807 + $0x18] sm:$0xff]
        %v1812 = vld [vmem:[%s1807 + $0x20] sm:$0xff]
        %v1813 = vld [vmem:[%s1807 + $0x28] sm:$0xff]
        %v1814 = vld [vmem:[%s1807 + $0x30] sm:$0xff]
        %v1815 = vld [vmem:[%s1807 + $0x38] sm:$0xff]
        %v1816 = vld [vmem:[%s1807 + $0x40] sm:$0xff]
        %v1817 = vld [vmem:[%s1807 + $0x48] sm:$0xff]
        %v1818 = vld [vmem:[%s1807 + $0x50] sm:$0xff]
        %v1819 = vld [vmem:[%s1807 + $0x58] sm:$0xff]
        %v1820 = vld [vmem:[%s1807 + $0x60] sm:$0xff]
        %v1821 = vld [vmem:[%s1807 + $0x68] sm:$0xff]
        %v1822 = vld [vmem:[%s1807 + $0x70] sm:$0xff]
        %v1823 = vld [vmem:[%s1807 + $0x78] sm:$0xff]
        %1824 = vmatprep.subr.mxu0 0.0
        %1825 = vmatpush1.msra.mxu0 %v1823
        %1826 = vmatprep.subr.mxu0 0.0
        %1827 = vmatpush1.msra.mxu0 %v1822
        %1828 = vmatprep.subr.mxu0 0.0
        %1829 = vmatpush1.msra.mxu0 %v1821
        %1830 = vmatprep.subr.mxu0 0.0
        %1831 = vmatpush1.msra.mxu0 %v1820
        %1832 = vmatprep.subr.mxu0 0.0
        %1833 = vmatpush1.msra.mxu0 %v1819
        %1834 = vmatprep.subr.mxu0 0.0
        %1835 = vmatpush1.msra.mxu0 %v1818
        %1836 = vmatprep.subr.mxu0 0.0
        %1837 = vmatpush1.msra.mxu0 %v1817
        %1838 = vmatprep.subr.mxu0 0.0
        %1839 = vmatpush1.msra.mxu0 %v1816
        %1840 = vmatprep.subr.mxu0 0.0
        %1841 = vmatpush1.msra.mxu0 %v1815
        %1842 = vmatprep.subr.mxu0 0.0
        %1843 = vmatpush1.msra.mxu0 %v1814
        %1844 = vmatprep.subr.mxu0 0.0
        %1845 = vmatpush1.msra.mxu0 %v1813
        %1846 = vmatprep.subr.mxu0 0.0
        %1847 = vmatpush1.msra.mxu0 %v1812
        %1848 = vmatprep.subr.mxu0 0.0
        %1849 = vmatpush1.msra.mxu0 %v1811
        %1850 = vmatprep.subr.mxu0 0.0
        %1851 = vmatpush1.msra.mxu0 %v1810
        %1852 = vmatprep.subr.mxu0 0.0
        %1853 = vmatpush1.msra.mxu0 %v1809
        %1854 = vmatprep.subr.mxu0 0.0
        %1855 = vmatpush1.msra.mxu0 %v1808
        %1856 = vmatprep.subr.mxu0 0.0
        %1857 = vmatpush2.msra.mxu0 0.0
        %1858 = vmatprep.subr.mxu0 0.0
        %1859 = vmatpush2.msra.mxu0 0.0
        %1860 = vmatprep.subr.mxu0 0.0
        %1861 = vmatpush2.msra.mxu0 0.0
        %1862 = vmatprep.subr.mxu0 0.0
        %1863 = vmatpush2.msra.mxu0 0.0
        %1864 = vmatprep.subr.mxu0 0.0
        %1865 = vmatpush2.msra.mxu0 0.0
        %1866 = vmatprep.subr.mxu0 0.0
        %1867 = vmatpush2.msra.mxu0 0.0
        %1868 = vmatprep.subr.mxu0 0.0
        %1869 = vmatpush2.msra.mxu0 0.0
        %1870 = vmatprep.subr.mxu0 0.0
        %1871 = vmatpush2.msra.mxu0 0.0
        %1872 = vmatprep.subr.mxu0 0.0
        %1873 = vmatpush2.msra.mxu0 0.0
        %1874 = vmatprep.subr.mxu0 0.0
        %1875 = vmatpush2.msra.mxu0 0.0
        %1876 = vmatprep.subr.mxu0 0.0
        %1877 = vmatpush2.msra.mxu0 0.0
        %1878 = vmatprep.subr.mxu0 0.0
        %1879 = vmatpush2.msra.mxu0 0.0
        %1880 = vmatprep.subr.mxu0 0.0
        %1881 = vmatpush2.msra.mxu0 0.0
        %1882 = vmatprep.subr.mxu0 0.0
        %1883 = vmatpush2.msra.mxu0 0.0
        %1884 = vmatprep.subr.mxu0 0.0
        %1885 = vmatpush2.msra.mxu0 0.0
        %1886 = vmatprep.subr.mxu0 0.0
        %1887 = vmatpush2.msra.mxu0 0.0
        %1888 = vmatprep.mubr.f32.mxu0 0.0
        %1889 = vmatmul.mubr.f32.gmra.mxu0 %v661
        %v1890 = vpop.f32.mrf.mxu0
        %v1891 = vadd.f32 0.0, %v1890
        %v1892 = vpop.f32.mrf.mxu0
        %1893 = vmatprep.mubr.f32.mxu0 0.0
        %1894 = vmatmul.mubr.f32.gmra.mxu0 %v663
        %v1895 = vpop.f32.mrf.mxu0
        %v1896 = vadd.f32 0.0, %v1895
        %v1897 = vpop.f32.mrf.mxu0
        %1898 = vmatprep.mubr.f32.mxu0 0.0
        %1899 = vmatmul.mubr.f32.gmra.mxu0 %v666
        %v1900 = vpop.f32.mrf.mxu0
        %v1901 = vadd.f32 0.0, %v1900
        %v1902 = vpop.f32.mrf.mxu0
        %1903 = vmatprep.mubr.f32.mxu0 0.0
        %1904 = vmatmul.mubr.f32.gmra.mxu0 %v668
        %v1905 = vpop.f32.mrf.mxu0
        %v1906 = vadd.f32 0.0, %v1905
        %v1907 = vpop.f32.mrf.mxu0
        %1908 = vmatprep.mubr.f32.mxu0 0.0
        %1909 = vmatmul.mubr.f32.gmra.mxu0 %v671
        %v1910 = vpop.f32.mrf.mxu0
        %v1911 = vadd.f32 0.0, %v1910
        %v1912 = vpop.f32.mrf.mxu0
        %1913 = vmatprep.mubr.f32.mxu0 0.0
        %1914 = vmatmul.mubr.f32.gmra.mxu0 %v673
        %v1915 = vpop.f32.mrf.mxu0
        %v1916 = vadd.f32 0.0, %v1915
        %v1917 = vpop.f32.mrf.mxu0
        %1918 = vmatprep.mubr.f32.mxu0 0.0
        %1919 = vmatmul.mubr.f32.gmra.mxu0 %v676
        %v1920 = vpop.f32.mrf.mxu0
        %v1921 = vadd.f32 0.0, %v1920
        %v1922 = vpop.f32.mrf.mxu0
        %1923 = vmatprep.mubr.f32.mxu0 0.0
        %1924 = vmatmul.mubr.f32.gmra.mxu0 %v678
        %v1925 = vpop.f32.mrf.mxu0
        %v1926 = vadd.f32 0.0, %v1925
        %v1927 = vpop.f32.mrf.mxu0
        %1928 = vmatprep.mubr.f32.mxu0 0.0
        %1929 = vmatmul.mubr.f32.gmra.mxu0 %v681
        %v1930 = vpop.f32.mrf.mxu0
        %v1931 = vadd.f32 0.0, %v1930
        %v1932 = vpop.f32.mrf.mxu0
        %1933 = vmatprep.mubr.f32.mxu0 0.0
        %1934 = vmatmul.mubr.f32.gmra.mxu0 %v683
        %v1935 = vpop.f32.mrf.mxu0
        %v1936 = vadd.f32 0.0, %v1935
        %v1937 = vpop.f32.mrf.mxu0
        %1938 = vmatprep.mubr.f32.mxu0 0.0
        %1939 = vmatmul.mubr.f32.gmra.mxu0 %v686
        %v1940 = vpop.f32.mrf.mxu0
        %v1941 = vadd.f32 0.0, %v1940
        %v1942 = vpop.f32.mrf.mxu0
        %1943 = vmatprep.mubr.f32.mxu0 0.0
        %1944 = vmatmul.mubr.f32.gmra.mxu0 %v688
        %v1945 = vpop.f32.mrf.mxu0
        %v1946 = vadd.f32 0.0, %v1945
        %v1947 = vpop.f32.mrf.mxu0
        %1948 = vmatprep.mubr.f32.mxu0 0.0
        %1949 = vmatmul.mubr.f32.gmra.mxu0 %v1251
        %v1950 = vpop.f32.mrf.mxu0
        %v1951 = vadd.f32 0.0, %v1950
        %v1952 = vpop.f32.mrf.mxu0
        %1953 = vmatprep.mubr.f32.mxu0 0.0
        %1954 = vmatmul.mubr.f32.gmra.mxu0 %v1253
        %v1955 = vpop.f32.mrf.mxu0
        %v1956 = vadd.f32 0.0, %v1955
        %v1957 = vpop.f32.mrf.mxu0
        %1958 = vmatprep.mubr.f32.mxu0 0.0
        %1959 = vmatmul.mubr.f32.gmra.mxu0 %v1802
        %v1960 = vpop.f32.mrf.mxu0
        %v1961 = vadd.f32 0.0, %v1960
        %v1962 = vpop.f32.mrf.mxu0
        %1963 = vmatprep.mubr.f32.mxu0 0.0
        %1964 = vmatmul.mubr.f32.gmra.mxu0 %v1804
        %v1965 = vpop.f32.mrf.mxu0
        %v1966 = vadd.f32 0.0, %v1965
        %v1967 = vpop.f32.mrf.mxu0
        %1968 = vdwg.mxu0
        %v1969 = vadd.f32 %v1784, %v1891
        %v1970 = vadd.f32 %v1785, %v1896
        %v1971 = vadd.f32 %v1786, %v1901
        %v1972 = vadd.f32 %v1787, %v1906
        %v1973 = vadd.f32 %v1788, %v1911
        %v1974 = vadd.f32 %v1789, %v1916
        %v1975 = vadd.f32 %v1790, %v1921
        %v1976 = vadd.f32 %v1791, %v1926
        %v1977 = vadd.f32 %v1792, %v1931
        %v1978 = vadd.f32 %v1793, %v1936
        %v1979 = vadd.f32 %v1794, %v1941
        %v1980 = vadd.f32 %v1795, %v1946
        %v1981 = vadd.f32 %v1796, %v1951
        %v1982 = vadd.f32 %v1797, %v1956
        %v1983 = vadd.f32 %v1798, %v1961
        %v1984 = vadd.f32 %v1799, %v1966
        %v1985 = vld [vmem:[%s2] sm:$0x1]
        %v1987 = vlaneseq
        %v1988 = vshrl.u32 %v1987, 7
        %v1989 = vsub.s32 0, %v1988
        %v1990 = vrot.slane %v1985, %v1989
        %v1992 = vmul.f32 %v1969, %v1990
        %v1993 = vmul.f32 %v1970, %v1990
        %v1994 = vmul.f32 %v1971, %v1990
        %v1995 = vmul.f32 %v1972, %v1990
        %v1996 = vmul.f32 %v1973, %v1990
        %v1997 = vmul.f32 %v1974, %v1990
        %v1998 = vmul.f32 %v1975, %v1990
        %v1999 = vmul.f32 %v1976, %v1990
        %v2000 = vmul.f32 %v1977, %v1990
        %v2001 = vmul.f32 %v1978, %v1990
        %v2002 = vmul.f32 %v1979, %v1990
        %v2003 = vmul.f32 %v1980, %v1990
        %v2004 = vmul.f32 %v1981, %v1990
        %v2005 = vmul.f32 %v1982, %v1990
        %v2006 = vmul.f32 %v1983, %v1990
        %v2007 = vmul.f32 %v1984, %v1990
        %v2008 = vld [vmem:[%s3] sm:$0x1]
        %v2010 = vlaneseq
        %v2011 = vshrl.u32 %v2010, 7
        %v2012 = vsub.s32 0, %v2011
        %v2013 = vrot.slane %v2008, %v2012
        %v2015 = vadd.f32 %v1992, %v2013
        %v2016 = vadd.f32 %v1993, %v2013
        %v2017 = vadd.f32 %v1994, %v2013
        %v2018 = vadd.f32 %v1995, %v2013
        %v2019 = vadd.f32 %v1996, %v2013
        %v2020 = vadd.f32 %v1997, %v2013
        %v2021 = vadd.f32 %v1998, %v2013
        %v2022 = vadd.f32 %v1999, %v2013
        %v2023 = vadd.f32 %v2000, %v2013
        %v2024 = vadd.f32 %v2001, %v2013
        %v2025 = vadd.f32 %v2002, %v2013
        %v2026 = vadd.f32 %v2003, %v2013
        %v2027 = vadd.f32 %v2004, %v2013
        %v2028 = vadd.f32 %v2005, %v2013
        %v2029 = vadd.f32 %v2006, %v2013
        %v2030 = vadd.f32 %v2007, %v2013
        %v2031 = vmax.f32 %v2015, 0.0
        %v2032 = vmax.f32 %v2016, 0.0
        %v2033 = vmax.f32 %v2017, 0.0
        %v2034 = vmax.f32 %v2018, 0.0
        %v2035 = vmax.f32 %v2019, 0.0
        %v2036 = vmax.f32 %v2020, 0.0
        %v2037 = vmax.f32 %v2021, 0.0
        %v2038 = vmax.f32 %v2022, 0.0
        %v2039 = vmax.f32 %v2023, 0.0
        %v2040 = vmax.f32 %v2024, 0.0
        %v2041 = vmax.f32 %v2025, 0.0
        %v2042 = vmax.f32 %v2026, 0.0
        %v2043 = vmax.f32 %v2027, 0.0
        %v2044 = vmax.f32 %v2028, 0.0
        %v2045 = vmax.f32 %v2029, 0.0
        %v2046 = vmax.f32 %v2030, 0.0
        %2047 = vst [vmem:[%s204] sm:$0xff] %v2031
        %2048 = vst [vmem:[%s204 + $0x8] sm:$0xff] %v2032
        %2049 = vst [vmem:[%s204 + $0x10] sm:$0xff] %v2033
        %2050 = vst [vmem:[%s204 + $0x18] sm:$0xff] %v2034
        %2051 = vst [vmem:[%s204 + $0x20] sm:$0xff] %v2035
        %2052 = vst [vmem:[%s204 + $0x28] sm:$0xff] %v2036
        %2053 = vst [vmem:[%s204 + $0x30] sm:$0xff] %v2037
        %2054 = vst [vmem:[%s204 + $0x38] sm:$0xff] %v2038
        %2055 = vst [vmem:[%s204 + $0x40] sm:$0xff] %v2039
        %2056 = vst [vmem:[%s204 + $0x48] sm:$0xff] %v2040
        %2057 = vst [vmem:[%s204 + $0x50] sm:$0xff] %v2041
        %2058 = vst [vmem:[%s204 + $0x58] sm:$0xff] %v2042
        %2059 = vst [vmem:[%s204 + $0x60] sm:$0xff] %v2043
        %2060 = vst [vmem:[%s204 + $0x68] sm:$0xff] %v2044
        %2061 = vst [vmem:[%s204 + $0x70] sm:$0xff] %v2045
        %2062 = vst [vmem:[%s204 + $0x78] sm:$0xff] %v2046
        %s2063 = sand.u32 %s129, 1
        %s2064 = scalar_lea.sflag [#allocation3], %s2063
        %s2065 = sand.u32 %s129, 1
        %s2066 = smul.addr %s2065, 128
        %s2067 = scalar_lea.vmem [#allocation2], %s2066
        // Predicated region
        $region37: #{tpu_custom_call.1} parent=35 // pred_check
          %p2068 = pneg %p139
        $region38: #{tpu_custom_call.1} parent=35 // pred_check_branch
          %2070 = sbr.rel (%p2068) target = $region40
        $region39: #{tpu_custom_call.1} parent=35 // pred_region
          %s2071 = smul.u32 8, %s23
          %s2073 = ssub.s32 2048, 2048
          %2074 = vsyncadd %s2064, %s2073
          %s2075 = smul.addr %s2071, 2
          %s2076 = smul.addr %s22, 32
          %s2077 = sadd.s32 %s2075, %s2076
          %s2078 = smul.addr %s2077, 128
          %s2079 = scalar_lea.hbm %s4, %s2078
          %s2080 = sshll.u32 %s2067, 4
          %s2081 = int_to_ptr.vmem [resolvable:$true] %s2080
          %2086 = dma.vmem_to_hbm [thread:$0]  %s2081, 2048, %s2079, %s2064, 128, 128, 8
        $region40: #{tpu_custom_call.1} parent=35 // pred_fallthru
          _
      $region36: #{tpu_custom_call.1} parent=5 // pred_fallthru
        _
      %p2087 = scmp.le.s32.totalorder 2, %s13
      // Predicated region
      $region41: #{tpu_custom_call.1} parent=5 // pred_check
        %p2088 = pneg %p2087
      $region42: #{tpu_custom_call.1} parent=5 // pred_check_branch
        %2090 = sbr.rel (%p2088) target = $region44
      $region43: #{tpu_custom_call.1} parent=5 // pred_region
        %s2091 = ssub.s32 %s13, 2
        // Predicated region
        $region45: #{tpu_custom_call.1} parent=43 // pred_check
          %p2092 = pneg %p145
        $region46: #{tpu_custom_call.1} parent=43 // pred_check_branch
          %2094 = sbr.rel (%p2092) target = $region48
        $region47: #{tpu_custom_call.1} parent=43 // pred_region
          %s2095 = sand.u32 %s130, 1
          %s2096 = scalar_lea.sflag [#allocation3], %s2095
          %s2097 = sand.u32 %s130, 1
          %s2098 = smul.addr %s2097, 128
          %s2099 = scalar_lea.vmem [#allocation2], %s2098
          %2100 = dma.done %s2096, 2048
        $region48: #{tpu_custom_call.1} parent=43 // pred_fallthru
          _
      $region44: #{tpu_custom_call.1} parent=5 // pred_fallthru
        _
    $region6: #{tpu_custom_call.1} parent=1 // loop_footer
      %s17 = sadd.s32 1, %s13
    $region7: #{tpu_custom_call.1} parent=1 // loop_footer_branch
      %12 = sbr.rel target = $region3
    $region8: #{tpu_custom_call.1} parent=1 // loop_exit
      _
    %2101 = vsyncpa [#allocation3], 1
    %s2102 = scalar_lea.sflag [#allocation3], 1
    %2103 = vsyncpa %s2102, 1

</llo_original>
